<compile_context>
chip_gen: v5e
topology: v5e:2x2
jax: 0.10.0
libtpu: 0.0.40
codegen_flags: <defaults>
</compile_context>

<pallas_src>
import jax
import jax.numpy as jnp
from jax import lax
from jax.experimental import pallas as pl
from jax.experimental.pallas import tpu as pltpu


def _conv7x7_as_matrix(w_oihw, H, W):
    """Expand a 7x7 'same' Conv2d weight (OIHW) into a dense matmul operand.

    Returns G of shape (n_in*H*W, n_out*H*W) such that, for channel-major
    flattened inputs  flat_in[b, i*H*W + h*W + w] = x[b, i, h, w],
        (flat_in @ G)[b, o*H*W + h*W + w] == Conv2d(k=7, pad=3, bias=False)(x)[b, o, h, w]
    with PyTorch cross-correlation semantics and zero padding.  Built once in the
    wrapper from static weights so each in-kernel conv is a single MXU matmul.
    """
    n_out, n_in, kh, kw = w_oihw.shape
    HW = H * W
    p = jnp.arange(HW)                                    # input flat index
    q = jnp.arange(HW)                                    # output flat index
    dy = (p // W)[:, None] - (q // W)[None, :] + kh // 2  # (HW, HW) -> ky
    dx = (p % W)[:, None] - (q % W)[None, :] + kw // 2    # (HW, HW) -> kx
    valid = (dy >= 0) & (dy < kh) & (dx >= 0) & (dx < kw)
    dy_c = jnp.clip(dy, 0, kh - 1)
    dx_c = jnp.clip(dx, 0, kw - 1)
    wk = w_oihw[:, :, dy_c, dx_c]                         # (n_out, n_in, HW, HW)
    wk = jnp.where(valid[None, None], wk, 0.0)
    return jnp.transpose(wk, (1, 2, 0, 3)).reshape(n_in * HW, n_out * HW)


def _cbam_kernel(x_ref, w1_ref, w2_ref, wg1a_ref, wg1b_ref, bg1_ref,
                 wg2_ref, bg2_ref, g1a_ref, g1b_ref, g2a_ref, g2b_ref, o_ref):
    Bt, C, HW = x_ref.shape
    x = x_ref[...].astype(jnp.float32)                    # (Bt, C, HW), lane-dense

    # ---------------- channel attention ----------------
    p_avg = jnp.sum(x, axis=2) * (1.0 / float(HW))        # (Bt, C) adaptive avg pool
    p_max = jnp.max(x, axis=2)                            # (Bt, C) adaptive max pool

    # Shared MLP fused over [avg; max] stacked along the row axis -> one matmul pair.
    p_stack = jnp.concatenate([p_avg, p_max], axis=0)     # (2*Bt, C)
    h = jnp.maximum(
        jnp.dot(p_stack, w1_ref[...], preferred_element_type=jnp.float32), 0.0)
    mlp_out = jnp.dot(h, w2_ref[...], preferred_element_type=jnp.float32)  # (2*Bt, C)
    avg_out = mlp_out[:Bt]                                 # (Bt, C)
    max_out = mlp_out[Bt:]                                 # (Bt, C)

    # Dynamic fusion gate, concat-free (wg1 pre-split along its input dim).
    gh = jnp.maximum(
        jnp.dot(p_avg, wg1a_ref[...], preferred_element_type=jnp.float32)
        + jnp.dot(p_max, wg1b_ref[...], preferred_element_type=jnp.float32)
        + bg1_ref[...], 0.0)                               # (Bt, Cr)
    fusion_gate = jax.nn.sigmoid(
        jnp.dot(gh, wg2_ref[...], preferred_element_type=jnp.float32)
        + bg2_ref[...])                                    # (Bt, C)

    channel_att = jax.nn.sigmoid(
        fusion_gate * avg_out + (1.0 - fusion_gate) * max_out)   # (Bt, C)

    # x1 is only needed to source the spatial reductions; it may die afterwards.
    x1 = x * channel_att[:, :, None]                       # (Bt, C, HW)

    # ---------------- spatial attention (convs as MXU matmuls) ----------------
    s_avg = jnp.sum(x1, axis=1) * (1.0 / float(C))         # (Bt, HW) mean over channels
    s_max = jnp.max(x1, axis=1)                            # (Bt, HW) max  over channels

    # Conv matrices pre-split per input channel (avg / max) -> no 2*HW concat.
    # bf16 operands, f32 accumulation.
    s_avg_b = s_avg.astype(jnp.bfloat16)
    s_max_b = s_max.astype(jnp.bfloat16)

    # spatial_gate = sigmoid(Conv2d(2->2, 7x7, pad=3)([avg|max]))
    gate = jax.nn.sigmoid(
        jnp.dot(s_avg_b, g1a_ref[...], preferred_element_type=jnp.float32)
        + jnp.dot(s_max_b, g1b_ref[...], preferred_element_type=jnp.float32))  # (Bt, 2*HW)

    gated_avg = (gate[:, :HW] * s_avg).astype(jnp.bfloat16)   # (Bt, HW)
    gated_max = (gate[:, HW:] * s_max).astype(jnp.bfloat16)   # (Bt, HW)

    # spatial_att = sigmoid(Conv2d(2->1, 7x7, pad=3)(gated))
    att = jax.nn.sigmoid(
        jnp.dot(gated_avg, g2a_ref[...], preferred_element_type=jnp.float32)
        + jnp.dot(gated_max, g2b_ref[...], preferred_element_type=jnp.float32))  # (Bt, HW)

    # Recompute x * channel_att at the store instead of reusing x1 (frees x1's
    # liveness across the conv section; one extra cheap VPU pass).
    o_ref[...] = (x * (channel_att[:, :, None] * att[:, None, :])).astype(o_ref.dtype)


def cbam_pallas(x_nchw, params, *, batch_tile=64):
    """CBAM forward.  batch_tile: ~64 is safe for v7x (64 MiB VMEM); 128-256 is
    fine on v5e/v6e (128 MiB VMEM)."""
    B, C, H, W = x_nchw.shape
    HW = H * W
    w1, w2 = params["w1"], params["w2"]
    wg1, bg1, wg2, bg2 = params["wg1"], params["bg1"], params["wg2"], params["bg2"]
    Cr = w1.shape[1]

    # Static weight preprocessing.
    # 7x7 convs -> dense matmul operands, split per input channel, cast to bf16.
    g1 = _conv7x7_as_matrix(params["wsg"].astype(jnp.float32), H, W)   # (2*HW, 2*HW)
    g2 = _conv7x7_as_matrix(params["wsc"].astype(jnp.float32), H, W)   # (2*HW, HW)
    g1a = g1[:HW].astype(jnp.bfloat16)      # avg-channel rows
    g1b = g1[HW:].astype(jnp.bfloat16)      # max-channel rows
    g2a = g2[:HW].astype(jnp.bfloat16)
    g2b = g2[HW:].astype(jnp.bfloat16)
    # Channel-gate first Linear split along its (concatenated) input dim.
    wg1_a = wg1[:C]
    wg1_b = wg1[C:]

    Bt = max(1, min(batch_tile, B))
    nb = pl.cdiv(B, Bt)
    if nb < 2 and B > 1:
        # Give the "parallel" batch axis at least two steps so both v7x
        # TensorCores get work (no-op on single-TC v5e/v6e).
        Bt = pl.cdiv(B, 2)
        nb = pl.cdiv(B, Bt)
    Bp = nb * Bt

    x_flat = x_nchw.reshape(B, C, HW)                      # free reshape (contiguous)
    if Bp != B:
        x_flat = jnp.pad(x_flat, ((0, Bp - B), (0, 0), (0, 0)))

    out_flat = pl.pallas_call(
        _cbam_kernel,
        out_shape=jax.ShapeDtypeStruct((Bp, C, HW), x_nchw.dtype),
        grid=(nb,),
        in_specs=[
            pl.BlockSpec((Bt, C, HW), lambda b: (b, 0, 0)),        # x (batch tile)
            pl.BlockSpec((C, Cr), lambda b: (0, 0)),               # fc W1 (in,out)
            pl.BlockSpec((Cr, C), lambda b: (0, 0)),               # fc W2
            pl.BlockSpec((C, Cr), lambda b: (0, 0)),               # gate W1, avg half
            pl.BlockSpec((C, Cr), lambda b: (0, 0)),               # gate W1, max half
            pl.BlockSpec((1, Cr), lambda b: (0, 0)),               # gate b1
            pl.BlockSpec((Cr, C), lambda b: (0, 0)),               # gate W2
            pl.BlockSpec((1, C), lambda b: (0, 0)),                # gate b2
            pl.BlockSpec((HW, 2 * HW), lambda b: (0, 0)),          # spatial_gate conv (avg rows)
            pl.BlockSpec((HW, 2 * HW), lambda b: (0, 0)),          # spatial_gate conv (max rows)
            pl.BlockSpec((HW, HW), lambda b: (0, 0)),              # spatial_conv (avg rows)
            pl.BlockSpec((HW, HW), lambda b: (0, 0)),              # spatial_conv (max rows)
        ],
        out_specs=pl.BlockSpec((Bt, C, HW), lambda b: (b, 0, 0)),
        compiler_params=pltpu.CompilerParams(
            dimension_semantics=("parallel",)),
    )(x_flat, w1, w2, wg1_a, wg1_b, bg1.reshape(1, Cr), wg2, bg2.reshape(1, C),
      g1a, g1b, g2a, g2b)

    return out_flat[:B].reshape(B, C, H, W)


def cbam_reference(x, params):
    """Pure-JAX reference matching the PyTorch forward (NCHW, full f32)."""
    w1, w2 = params["w1"], params["w2"]
    wg1, bg1, wg2, bg2 = params["wg1"], params["bg1"], params["wg2"], params["bg2"]
    wsg, wsc = params["wsg"], params["wsc"]

    avg_p = jnp.mean(x, axis=(2, 3))
    max_p = jnp.max(x, axis=(2, 3))
    fc = lambda p: jnp.maximum(p @ w1, 0.0) @ w2
    avg_out = fc(avg_p)
    max_out = fc(max_p)
    gate_in = jnp.concatenate([avg_p, max_p], axis=1)
    fusion_gate = jax.nn.sigmoid(jnp.maximum(gate_in @ wg1 + bg1, 0.0) @ wg2 + bg2)
    channel_att = jax.nn.sigmoid(fusion_gate * avg_out + (1.0 - fusion_gate) * max_out)
    x1 = x * channel_att[:, :, None, None]

    s_avg = jnp.mean(x1, axis=1, keepdims=True)
    s_max = jnp.max(x1, axis=1, keepdims=True)
    feat = jnp.concatenate([s_avg, s_max], axis=1)
    dn = ("NCHW", "OIHW", "NCHW")
    spatial_gate = jax.nn.sigmoid(
        lax.conv_general_dilated(feat, wsg, (1, 1), "SAME", dimension_numbers=dn))
    gated = spatial_gate * feat
    spatial_att = jax.nn.sigmoid(
        lax.conv_general_dilated(gated, wsc, (1, 1), "SAME", dimension_numbers=dn))
    return x1 * spatial_att


if __name__ == "__main__":
    B, C, H, W = 2, 32, 16, 16
    reduction = 16
    Cr = C // reduction

    key = jax.random.PRNGKey(0)
    ks = jax.random.split(key, 9)
    x = jax.random.normal(ks[0], (B, C, H, W), jnp.float32)

    # Deterministic synthetic parameters (shapes from CBAM.__init__; linear
    # weights stored as (in, out), conv weights as OIHW like PyTorch).
    params = {
        "w1":  jax.random.normal(ks[1], (C, Cr), jnp.float32) * 0.2,
        "w2":  jax.random.normal(ks[2], (Cr, C), jnp.float32) * 0.2,
        "wg1": jax.random.normal(ks[3], (2 * C, Cr), jnp.float32) * 0.2,
        "bg1": jax.random.normal(ks[4], (Cr,), jnp.float32) * 0.1,
        "wg2": jax.random.normal(ks[5], (Cr, C), jnp.float32) * 0.2,
        "bg2": jax.random.normal(ks[6], (C,), jnp.float32) * 0.1,
        "wsg": jax.random.normal(ks[7], (2, 2, 7, 7), jnp.float32) * 0.1,
        "wsc": jax.random.normal(ks[8], (1, 2, 7, 7), jnp.float32) * 0.1,
    }

    out = jax.block_until_ready(cbam_pallas(x, params))
    ref = jax.block_until_ready(cbam_reference(x, params))

    assert out.shape == x.shape and out.dtype == x.dtype
    # Tolerance accounts for the bf16 operands of the spatial-conv matmuls
    # (accumulation stays f32); everything else is f32.
    max_err = float(jnp.max(jnp.abs(out - ref)))
    if max_err > 2e-2:
        raise AssertionError(f"Pallas CBAM mismatch vs reference, max abs err = {max_err}")
    print("KERNEL_OK")
</pallas_src>

<mosaic_0001>
module attributes {stable_mosaic.version = 11 : i64} {
  func.func @_cbam_kernel(%arg0: i32, %arg1: memref<1x32x256xf32, #tpu.memory_space<vmem>>, %arg2: memref<32x2xf32, #tpu.memory_space<vmem>>, %arg3: memref<2x32xf32, #tpu.memory_space<vmem>>, %arg4: memref<32x2xf32, #tpu.memory_space<vmem>>, %arg5: memref<32x2xf32, #tpu.memory_space<vmem>>, %arg6: memref<1x2xf32, #tpu.memory_space<vmem>>, %arg7: memref<2x32xf32, #tpu.memory_space<vmem>>, %arg8: memref<1x32xf32, #tpu.memory_space<vmem>>, %arg9: memref<256x512xbf16, #tpu.memory_space<vmem>>, %arg10: memref<256x512xbf16, #tpu.memory_space<vmem>>, %arg11: memref<256x256xbf16, #tpu.memory_space<vmem>>, %arg12: memref<256x256xbf16, #tpu.memory_space<vmem>>, %arg13: memref<1x32x256xf32, #tpu.memory_space<vmem>>) attributes {dimension_semantics = [#tpu.dimension_semantics<parallel>], iteration_bounds = array<i64: 2>, scalar_prefetch = 0 : i64, scratch_operands = 0 : i64, tpu.core_type = #tpu.core_type<tc>, window_params = [{transform_indices = @transform_0, window_bounds = array<i64: 1, 32, 256>}, {pipeline_mode = #tpu.pipeline_mode<synchronous>, transform_indices = @transform_1, window_bounds = array<i64: 32, 2>}, {pipeline_mode = #tpu.pipeline_mode<synchronous>, transform_indices = @transform_2, window_bounds = array<i64: 2, 32>}, {pipeline_mode = #tpu.pipeline_mode<synchronous>, transform_indices = @transform_3, window_bounds = array<i64: 32, 2>}, {pipeline_mode = #tpu.pipeline_mode<synchronous>, transform_indices = @transform_4, window_bounds = array<i64: 32, 2>}, {pipeline_mode = #tpu.pipeline_mode<synchronous>, transform_indices = @transform_5, window_bounds = array<i64: 1, 2>}, {pipeline_mode = #tpu.pipeline_mode<synchronous>, transform_indices = @transform_6, window_bounds = array<i64: 2, 32>}, {pipeline_mode = #tpu.pipeline_mode<synchronous>, transform_indices = @transform_7, window_bounds = array<i64: 1, 32>}, {pipeline_mode = #tpu.pipeline_mode<synchronous>, transform_indices = @transform_8, window_bounds = array<i64: 256, 512>}, {pipeline_mode = #tpu.pipeline_mode<synchronous>, transform_indices = @transform_9, window_bounds = array<i64: 256, 512>}, {pipeline_mode = #tpu.pipeline_mode<synchronous>, transform_indices = @transform_10, window_bounds = array<i64: 256, 256>}, {pipeline_mode = #tpu.pipeline_mode<synchronous>, transform_indices = @transform_11, window_bounds = array<i64: 256, 256>}, {transform_indices = @transform_12, window_bounds = array<i64: 1, 32, 256>}]} {
    %c0 = arith.constant 0 : index
    %c0_0 = arith.constant 0 : index
    %c0_1 = arith.constant 0 : index
    %0 = vector.load %arg1[%c0, %c0_0, %c0_1] : memref<1x32x256xf32, #tpu.memory_space<vmem>>, vector<1x32x256xf32>
    %cst = arith.constant dense<0.000000e+00> : vector<1x32xf32>
    %1 = vector.multi_reduction <add>, %0, %cst [2] : vector<1x32x256xf32> to vector<1x32xf32>
    %cst_2 = arith.constant 3.906250e-03 : f32
    %2 = vector.broadcast %cst_2 : f32 to vector<1x32xf32>
    %3 = arith.mulf %1, %2 : vector<1x32xf32>
    %cst_3 = arith.constant dense<0xFF800000> : vector<1x32xf32>
    %4 = vector.multi_reduction <maximumf>, %0, %cst_3 [2] : vector<1x32x256xf32> to vector<1x32xf32>
    %5 = tpu.concatenate %3, %4 in 0 : vector<1x32xf32>, vector<1x32xf32> -> vector<2x32xf32>
    %c0_4 = arith.constant 0 : index
    %c0_5 = arith.constant 0 : index
    %6 = vector.load %arg2[%c0_4, %c0_5] : memref<32x2xf32, #tpu.memory_space<vmem>>, vector<32x2xf32>
    %cst_6 = arith.constant dense<0.000000e+00> : vector<2x2xf32>
    %7 = tpu.matmul %5, %6, %cst_6 {dimension_numbers = #tpu.dot_dimension_numbers<[1], [0], [0], [1], [0, 0, 1, 1], [], []>} : vector<2x32xf32>, vector<32x2xf32>, vector<2x2xf32> -> vector<2x2xf32>
    %cst_7 = arith.constant 0.000000e+00 : f32
    %8 = vector.broadcast %cst_7 : f32 to vector<2x2xf32>
    %9 = arith.maximumf %7, %8 : vector<2x2xf32>
    %c0_8 = arith.constant 0 : index
    %c0_9 = arith.constant 0 : index
    %10 = vector.load %arg3[%c0_8, %c0_9] : memref<2x32xf32, #tpu.memory_space<vmem>>, vector<2x32xf32>
    %cst_10 = arith.constant dense<0.000000e+00> : vector<2x32xf32>
    %11 = tpu.matmul %9, %10, %cst_10 {dimension_numbers = #tpu.dot_dimension_numbers<[1], [0], [0], [1], [0, 0, 1, 1], [], []>} : vector<2x2xf32>, vector<2x32xf32>, vector<2x32xf32> -> vector<2x32xf32>
    %12 = vector.extract_strided_slice %11 {offsets = [0, 0], sizes = [1, 32], strides = [1, 1]} : vector<2x32xf32> to vector<1x32xf32>
    %13 = vector.extract_strided_slice %11 {offsets = [1, 0], sizes = [1, 32], strides = [1, 1]} : vector<2x32xf32> to vector<1x32xf32>
    %c0_11 = arith.constant 0 : index
    %c0_12 = arith.constant 0 : index
    %14 = vector.load %arg4[%c0_11, %c0_12] : memref<32x2xf32, #tpu.memory_space<vmem>>, vector<32x2xf32>
    %cst_13 = arith.constant dense<0.000000e+00> : vector<1x2xf32>
    %15 = tpu.matmul %3, %14, %cst_13 {dimension_numbers = #tpu.dot_dimension_numbers<[1], [0], [0], [1], [0, 0, 1, 1], [], []>} : vector<1x32xf32>, vector<32x2xf32>, vector<1x2xf32> -> vector<1x2xf32>
    %c0_14 = arith.constant 0 : index
    %c0_15 = arith.constant 0 : index
    %16 = vector.load %arg5[%c0_14, %c0_15] : memref<32x2xf32, #tpu.memory_space<vmem>>, vector<32x2xf32>
    %cst_16 = arith.constant dense<0.000000e+00> : vector<1x2xf32>
    %17 = tpu.matmul %4, %16, %cst_16 {dimension_numbers = #tpu.dot_dimension_numbers<[1], [0], [0], [1], [0, 0, 1, 1], [], []>} : vector<1x32xf32>, vector<32x2xf32>, vector<1x2xf32> -> vector<1x2xf32>
    %18 = arith.addf %15, %17 : vector<1x2xf32>
    %c0_17 = arith.constant 0 : index
    %c0_18 = arith.constant 0 : index
    %19 = vector.load %arg6[%c0_17, %c0_18] : memref<1x2xf32, #tpu.memory_space<vmem>>, vector<1x2xf32>
    %20 = arith.addf %18, %19 : vector<1x2xf32>
    %cst_19 = arith.constant 0.000000e+00 : f32
    %21 = vector.broadcast %cst_19 : f32 to vector<1x2xf32>
    %22 = arith.maximumf %20, %21 : vector<1x2xf32>
    %c0_20 = arith.constant 0 : index
    %c0_21 = arith.constant 0 : index
    %23 = vector.load %arg7[%c0_20, %c0_21] : memref<2x32xf32, #tpu.memory_space<vmem>>, vector<2x32xf32>
    %cst_22 = arith.constant dense<0.000000e+00> : vector<1x32xf32>
    %24 = tpu.matmul %22, %23, %cst_22 {dimension_numbers = #tpu.dot_dimension_numbers<[1], [0], [0], [1], [0, 0, 1, 1], [], []>} : vector<1x2xf32>, vector<2x32xf32>, vector<1x32xf32> -> vector<1x32xf32>
    %c0_23 = arith.constant 0 : index
    %c0_24 = arith.constant 0 : index
    %25 = vector.load %arg8[%c0_23, %c0_24] : memref<1x32xf32, #tpu.memory_space<vmem>>, vector<1x32xf32>
    %26 = arith.addf %24, %25 : vector<1x32xf32>
    %27 = arith.negf %26 : vector<1x32xf32>
    %28 = math.exp %27 : vector<1x32xf32>
    %cst_25 = arith.constant 1.000000e+00 : f32
    %29 = vector.broadcast %cst_25 : f32 to vector<1x32xf32>
    %30 = arith.addf %29, %28 : vector<1x32xf32>
    %31 = arith.divf %29, %30 : vector<1x32xf32>
    %32 = arith.mulf %31, %12 : vector<1x32xf32>
    %cst_26 = arith.constant 1.000000e+00 : f32
    %33 = vector.broadcast %cst_26 : f32 to vector<1x32xf32>
    %34 = arith.subf %33, %31 : vector<1x32xf32>
    %35 = arith.mulf %34, %13 : vector<1x32xf32>
    %36 = arith.addf %32, %35 : vector<1x32xf32>
    %37 = arith.negf %36 : vector<1x32xf32>
    %38 = math.exp %37 : vector<1x32xf32>
    %cst_27 = arith.constant 1.000000e+00 : f32
    %39 = vector.broadcast %cst_27 : f32 to vector<1x32xf32>
    %40 = arith.addf %39, %38 : vector<1x32xf32>
    %41 = arith.divf %39, %40 : vector<1x32xf32>
    %42 = vector.shape_cast %41 : vector<1x32xf32> to vector<1x32x1xf32>
    %43 = vector.broadcast %42 : vector<1x32x1xf32> to vector<1x32x256xf32>
    %44 = arith.mulf %0, %43 : vector<1x32x256xf32>
    %cst_28 = arith.constant dense<0.000000e+00> : vector<1x256xf32>
    %45 = vector.multi_reduction <add>, %44, %cst_28 [1] : vector<1x32x256xf32> to vector<1x256xf32>
    %cst_29 = arith.constant 3.125000e-02 : f32
    %46 = vector.broadcast %cst_29 : f32 to vector<1x256xf32>
    %47 = arith.mulf %45, %46 : vector<1x256xf32>
    %cst_30 = arith.constant dense<0xFF800000> : vector<1x256xf32>
    %48 = vector.multi_reduction <maximumf>, %44, %cst_30 [1] : vector<1x32x256xf32> to vector<1x256xf32>
    %49 = arith.truncf %47 : vector<1x256xf32> to vector<1x256xbf16>
    %50 = arith.truncf %48 : vector<1x256xf32> to vector<1x256xbf16>
    %c0_31 = arith.constant 0 : index
    %c0_32 = arith.constant 0 : index
    %51 = vector.load %arg9[%c0_31, %c0_32] : memref<256x512xbf16, #tpu.memory_space<vmem>>, vector<256x512xbf16>
    %cst_33 = arith.constant dense<0.000000e+00> : vector<1x512xf32>
    %52 = tpu.matmul %49, %51, %cst_33 {dimension_numbers = #tpu.dot_dimension_numbers<[1], [0], [0], [1], [0, 0, 1, 1], [], []>} : vector<1x256xbf16>, vector<256x512xbf16>, vector<1x512xf32> -> vector<1x512xf32>
    %c0_34 = arith.constant 0 : index
    %c0_35 = arith.constant 0 : index
    %53 = vector.load %arg10[%c0_34, %c0_35] : memref<256x512xbf16, #tpu.memory_space<vmem>>, vector<256x512xbf16>
    %cst_36 = arith.constant dense<0.000000e+00> : vector<1x512xf32>
    %54 = tpu.matmul %50, %53, %cst_36 {dimension_numbers = #tpu.dot_dimension_numbers<[1], [0], [0], [1], [0, 0, 1, 1], [], []>} : vector<1x256xbf16>, vector<256x512xbf16>, vector<1x512xf32> -> vector<1x512xf32>
    %55 = arith.addf %52, %54 : vector<1x512xf32>
    %56 = arith.negf %55 : vector<1x512xf32>
    %57 = math.exp %56 : vector<1x512xf32>
    %cst_37 = arith.constant 1.000000e+00 : f32
    %58 = vector.broadcast %cst_37 : f32 to vector<1x512xf32>
    %59 = arith.addf %58, %57 : vector<1x512xf32>
    %60 = arith.divf %58, %59 : vector<1x512xf32>
    %61 = vector.extract_strided_slice %60 {offsets = [0, 0], sizes = [1, 256], strides = [1, 1]} : vector<1x512xf32> to vector<1x256xf32>
    %62 = arith.mulf %61, %47 : vector<1x256xf32>
    %63 = arith.truncf %62 : vector<1x256xf32> to vector<1x256xbf16>
    %64 = vector.extract_strided_slice %60 {offsets = [0, 256], sizes = [1, 256], strides = [1, 1]} : vector<1x512xf32> to vector<1x256xf32>
    %65 = arith.mulf %64, %48 : vector<1x256xf32>
    %66 = arith.truncf %65 : vector<1x256xf32> to vector<1x256xbf16>
    %c0_38 = arith.constant 0 : index
    %c0_39 = arith.constant 0 : index
    %67 = vector.load %arg11[%c0_38, %c0_39] : memref<256x256xbf16, #tpu.memory_space<vmem>>, vector<256x256xbf16>
    %cst_40 = arith.constant dense<0.000000e+00> : vector<1x256xf32>
    %68 = tpu.matmul %63, %67, %cst_40 {dimension_numbers = #tpu.dot_dimension_numbers<[1], [0], [0], [1], [0, 0, 1, 1], [], []>} : vector<1x256xbf16>, vector<256x256xbf16>, vector<1x256xf32> -> vector<1x256xf32>
    %c0_41 = arith.constant 0 : index
    %c0_42 = arith.constant 0 : index
    %69 = vector.load %arg12[%c0_41, %c0_42] : memref<256x256xbf16, #tpu.memory_space<vmem>>, vector<256x256xbf16>
    %cst_43 = arith.constant dense<0.000000e+00> : vector<1x256xf32>
    %70 = tpu.matmul %66, %69, %cst_43 {dimension_numbers = #tpu.dot_dimension_numbers<[1], [0], [0], [1], [0, 0, 1, 1], [], []>} : vector<1x256xbf16>, vector<256x256xbf16>, vector<1x256xf32> -> vector<1x256xf32>
    %71 = arith.addf %68, %70 : vector<1x256xf32>
    %72 = arith.negf %71 : vector<1x256xf32>
    %73 = math.exp %72 : vector<1x256xf32>
    %cst_44 = arith.constant 1.000000e+00 : f32
    %74 = vector.broadcast %cst_44 : f32 to vector<1x256xf32>
    %75 = arith.addf %74, %73 : vector<1x256xf32>
    %76 = arith.divf %74, %75 : vector<1x256xf32>
    %77 = vector.shape_cast %41 : vector<1x32xf32> to vector<1x32x1xf32>
    %78 = vector.shape_cast %76 : vector<1x256xf32> to vector<1x1x256xf32>
    %79 = vector.broadcast %77 : vector<1x32x1xf32> to vector<1x32x256xf32>
    %80 = vector.broadcast %78 : vector<1x1x256xf32> to vector<1x32x256xf32>
    %81 = arith.mulf %79, %80 : vector<1x32x256xf32>
    %82 = arith.mulf %0, %81 : vector<1x32x256xf32>
    %c0_45 = arith.constant 0 : index
    %c0_46 = arith.constant 0 : index
    %c0_47 = arith.constant 0 : index
    %83 = vector.load %arg13[%c0_45, %c0_46, %c0_47] : memref<1x32x256xf32, #tpu.memory_space<vmem>>, vector<1x32x256xf32>
    tpu.vector_store %arg13[%c0_45, %c0_46, %c0_47], %82 {strides = array<i32>} : memref<1x32x256xf32, #tpu.memory_space<vmem>>, vector<1x32x256xf32>,
    return
  }
  func.func @transform_0(%arg0: i32) -> (i32, i32, i32) {
    %c0_i32 = arith.constant 0 : i32
    %c0_i32_0 = arith.constant 0 : i32
    %c0_i32_1 = arith.constant 0 : i32
    return %arg0, %c0_i32, %c0_i32_0 : i32, i32, i32
  }
  func.func @transform_1(%arg0: i32) -> (i32, i32) {
    %c0_i32 = arith.constant 0 : i32
    %c0_i32_0 = arith.constant 0 : i32
    %c0_i32_1 = arith.constant 0 : i32
    return %c0_i32, %c0_i32_0 : i32, i32
  }
  func.func @transform_2(%arg0: i32) -> (i32, i32) {
    %c0_i32 = arith.constant 0 : i32
    %c0_i32_0 = arith.constant 0 : i32
    %c0_i32_1 = arith.constant 0 : i32
    return %c0_i32, %c0_i32_0 : i32, i32
  }
  func.func @transform_3(%arg0: i32) -> (i32, i32) {
    %c0_i32 = arith.constant 0 : i32
    %c0_i32_0 = arith.constant 0 : i32
    %c0_i32_1 = arith.constant 0 : i32
    return %c0_i32, %c0_i32_0 : i32, i32
  }
  func.func @transform_4(%arg0: i32) -> (i32, i32) {
    %c0_i32 = arith.constant 0 : i32
    %c0_i32_0 = arith.constant 0 : i32
    %c0_i32_1 = arith.constant 0 : i32
    return %c0_i32, %c0_i32_0 : i32, i32
  }
  func.func @transform_5(%arg0: i32) -> (i32, i32) {
    %c0_i32 = arith.constant 0 : i32
    %c0_i32_0 = arith.constant 0 : i32
    %c0_i32_1 = arith.constant 0 : i32
    return %c0_i32, %c0_i32_0 : i32, i32
  }
  func.func @transform_6(%arg0: i32) -> (i32, i32) {
    %c0_i32 = arith.constant 0 : i32
    %c0_i32_0 = arith.constant 0 : i32
    %c0_i32_1 = arith.constant 0 : i32
    return %c0_i32, %c0_i32_0 : i32, i32
  }
  func.func @transform_7(%arg0: i32) -> (i32, i32) {
    %c0_i32 = arith.constant 0 : i32
    %c0_i32_0 = arith.constant 0 : i32
    %c0_i32_1 = arith.constant 0 : i32
    return %c0_i32, %c0_i32_0 : i32, i32
  }
  func.func @transform_8(%arg0: i32) -> (i32, i32) {
    %c0_i32 = arith.constant 0 : i32
    %c0_i32_0 = arith.constant 0 : i32
    %c0_i32_1 = arith.constant 0 : i32
    return %c0_i32, %c0_i32_0 : i32, i32
  }
  func.func @transform_9(%arg0: i32) -> (i32, i32) {
    %c0_i32 = arith.constant 0 : i32
    %c0_i32_0 = arith.constant 0 : i32
    %c0_i32_1 = arith.constant 0 : i32
    return %c0_i32, %c0_i32_0 : i32, i32
  }
  func.func @transform_10(%arg0: i32) -> (i32, i32) {
    %c0_i32 = arith.constant 0 : i32
    %c0_i32_0 = arith.constant 0 : i32
    %c0_i32_1 = arith.constant 0 : i32
    return %c0_i32, %c0_i32_0 : i32, i32
  }
  func.func @transform_11(%arg0: i32) -> (i32, i32) {
    %c0_i32 = arith.constant 0 : i32
    %c0_i32_0 = arith.constant 0 : i32
    %c0_i32_1 = arith.constant 0 : i32
    return %c0_i32, %c0_i32_0 : i32, i32
  }
  func.func @transform_12(%arg0: i32) -> (i32, i32, i32) {
    %c0_i32 = arith.constant 0 : i32
    %c0_i32_0 = arith.constant 0 : i32
    %c0_i32_1 = arith.constant 0 : i32
    return %arg0, %c0_i32, %c0_i32_0 : i32, i32, i32
  }
}

</mosaic_0001>

<llo_original>
// kernel: tpu_custom_call.1
$region0: #{tpu_custom_call.1}
  #allocation0 [shape = 'u32[]', space=smem, size = 0x4, offset = 0x4, fixed_abs, tag = 'smem constant byte address 0x4 - core index']
  #allocation1 [shape = 'u32[72,128]{1,0:T(1,128)}', space=vmem, size = 0x9000, scoped, tag = 'internal scratch']
  %s0 = inlined_call_operand.hbm [shape: f32[2,32,256], index: 0, kind: input, shape index: {}]
  %s1 = inlined_call_operand.vmem [shape: f32[32,2], index: 1, kind: input, shape index: {}]
  %s2 = inlined_call_operand.vmem [shape: f32[2,32], index: 2, kind: input, shape index: {}]
  %s3 = inlined_call_operand.vmem [shape: f32[32,2], index: 3, kind: input, shape index: {}]
  %s4 = inlined_call_operand.vmem [shape: f32[32,2], index: 4, kind: input, shape index: {}]
  %s5 = inlined_call_operand.vmem [shape: f32[1,2], index: 5, kind: input, shape index: {}]
  %s6 = inlined_call_operand.vmem [shape: f32[2,32], index: 6, kind: input, shape index: {}]
  %s7 = inlined_call_operand.vmem [shape: f32[1,32], index: 7, kind: input, shape index: {}]
  %s8 = inlined_call_operand.hbm [shape: bf16[256,512], index: 8, kind: input, shape index: {}]
  %s9 = inlined_call_operand.hbm [shape: bf16[256,512], index: 9, kind: input, shape index: {}]
  %s10 = inlined_call_operand.hbm [shape: bf16[256,256], index: 10, kind: input, shape index: {}]
  %s11 = inlined_call_operand.hbm [shape: bf16[256,256], index: 11, kind: input, shape index: {}]
  %s12 = inlined_call_operand.hbm [shape: f32[2,32,256], index: 12, kind: output, shape index: {}]
  %s13 = sld [smem:[#allocation0]]
  $region101: #{tpu_custom_call.1} parent=0
    _
  %s15 = ssub.s32 1, %s13
  %s16 = scalar_select 0, %s15, %s13
  $region1: #{tpu_custom_call.1} parent=0
    #allocation2 [shape = 'u8[65536]{0}', space=vmem, size = 0x10000, scoped, tag = 'input window, operand 0']
    #allocation3 [shape = 's32[2]{0}', space=sflag, size = 0x8, scoped, tag = 'scoped memory for tpu_custom_call.1']
    #allocation4 [shape = 's32[2]{0}', space=sflag, size = 0x8, scoped, tag = 'scoped memory for tpu_custom_call.1']
    #allocation5 [shape = 'u8[262144]{0}', space=vmem, size = 0x40000, scoped, tag = 'input window, operand 8, single buffered']
    #allocation6 [shape = 's32[1]{0}', space=sflag, size = 0x4, scoped, tag = 'scoped memory for tpu_custom_call.1']
    #allocation7 [shape = 'u8[262144]{0}', space=vmem, size = 0x40000, scoped, tag = 'input window, operand 9, single buffered']
    #allocation8 [shape = 'u8[131072]{0}', space=vmem, size = 0x20000, scoped, tag = 'input window, operand 10, single buffered']
    #allocation9 [shape = 's32[1]{0}', space=sflag, size = 0x4, scoped, tag = 'scoped memory for tpu_custom_call.1']
    #allocation10 [shape = 'u8[131072]{0}', space=vmem, size = 0x20000, scoped, tag = 'input window, operand 11, single buffered']
    #allocation11 [shape = 'u8[65536]{0}', space=vmem, size = 0x10000, scoped, tag = 'output window, operand 0']
    %17 = vsyncpa [#allocation3], 0
    %s18 = scalar_lea.sflag [#allocation3], 1
    %19 = vsyncpa %s18, 0
    %20 = vsyncpa [#allocation6], 0
    %21 = vsyncpa [#allocation9], 0
    %22 = vsyncpa [#allocation4], 0
    %s23 = scalar_lea.sflag [#allocation4], 1
    %24 = vsyncpa %s23, 0
    loop: start=0, step=1, limit=4
    $region2: #{tpu_custom_call.1} parent=1 // loop_pre_header
      _
    $region3: #{tpu_custom_call.1} parent=1 // loop_header
      %s26 = sphi 0, %s30
      %p27 = scmp.ge.s32.totalorder %s26, 4
      %s36 = sphi 0, %s38
      %s39 = sphi 0, %s36
      %s40 = sphi 0, %s39
      %s56 = sphi 0, %s40
      %s60 = sphi 0, %s60
      %s62 = sphi 0, %s60
      %s63 = sphi 0, %s62
      %s77 = sphi 0, %s63
      %s81 = sphi 0, %s81
      %s83 = sphi 0, %s81
      %s84 = sphi 0, %s83
      %s98 = sphi 0, %s84
      %s102 = sphi 0, %s102
      %s104 = sphi 0, %s102
      %s105 = sphi 0, %s104
      %s119 = sphi 0, %s105
      %s123 = sphi 0, %s123
      %s125 = sphi 0, %s123
      %s126 = sphi 0, %s125
      %s140 = sphi 0, %s126
      %s144 = sphi 0, %s144
      %s146 = sphi 0, %s144
      %s147 = sphi 0, %s146
      %s161 = sphi 0, %s147
      %s165 = sphi 0, %s165
      %s167 = sphi 0, %s165
      %s168 = sphi 0, %s167
      %s182 = sphi 0, %s168
      %s186 = sphi 0, %s186
      %s188 = sphi 0, %s186
      %s189 = sphi 0, %s188
      %s203 = sphi 0, %s189
      %s207 = sphi 0, %s207
      %s209 = sphi 0, %s207
      %s210 = sphi 0, %s209
      %s224 = sphi 0, %s210
      %s228 = sphi 0, %s228
      %s230 = sphi 0, %s228
      %s231 = sphi 0, %s230
      %s245 = sphi 0, %s231
      %s249 = sphi 0, %s249
      %s251 = sphi 0, %s249
      %s252 = sphi 0, %s251
      %s266 = sphi 0, %s252
      %s270 = sphi 0, %s270
      %s272 = sphi 0, %s270
      %s273 = sphi 0, %s272
      %s287 = sphi 0, %s273
      %s293 = sphi 0, %s295
      %s296 = sphi 0, %s293
      %s297 = sphi 0, %s296
      %s313 = sphi 0, %s297
    $region4: #{tpu_custom_call.1} parent=1 // loop_header_branch
      %29 = sbr.rel (%p27) target = $region8
    $region5: #{tpu_custom_call.1} parent=1 // loop_body
      %s31 = ssub.s32 %s26, 1
      %s32 = ssub.s32 %s26, 2
      %s33 = sadd.s32 %s26, 1
      %s34 = ssub.s32 %s26, %s33
      %p35 = scmp.eq.s32.totalorder %s34, 0
      %s37 = sadd.s32 %s36, 1
      %s38 = scalar_select %p35, %s36, %s37
      %p41 = pneg %p35
      %p42 = scmp.eq.s32.totalorder %s26, 1
      %p43 = por %p41, %p42
      %p44 = scmp.ne.s32.totalorder %s36, %s39
      %p45 = scmp.eq.s32.totalorder %s26, 0
      %p46 = por %p44, %p45
      %p47 = scmp.ne.s32.totalorder %s36, %s39
      %p48 = scmp.eq.s32.totalorder %s31, 1
      %p49 = por %p47, %p48
      %p50 = scmp.ne.s32.totalorder %s39, %s40
      %p51 = scmp.eq.s32.totalorder %s31, 0
      %p52 = por %p50, %p51
      %p53 = scmp.ne.s32.totalorder %s39, %s40
      %p54 = scmp.eq.s32.totalorder %s32, 1
      %p55 = por %p53, %p54
      %p57 = scmp.ne.s32.totalorder %s40, %s56
      %p58 = scmp.eq.s32.totalorder %s32, 0
      %p59 = por %p57, %p58
      %s61 = sadd.s32 %s60, 1
      %p64 = scmp.eq.s32.totalorder %s26, 1
      %p65 = scmp.ne.s32.totalorder %s60, %s62
      %p66 = scmp.eq.s32.totalorder %s26, 0
      %p67 = por %p65, %p66
      %p68 = scmp.ne.s32.totalorder %s60, %s62
      %p69 = scmp.eq.s32.totalorder %s31, 1
      %p70 = por %p68, %p69
      %p71 = scmp.ne.s32.totalorder %s62, %s63
      %p72 = scmp.eq.s32.totalorder %s31, 0
      %p73 = por %p71, %p72
      %p74 = scmp.ne.s32.totalorder %s62, %s63
      %p75 = scmp.eq.s32.totalorder %s32, 1
      %p76 = por %p74, %p75
      %p78 = scmp.ne.s32.totalorder %s63, %s77
      %p79 = scmp.eq.s32.totalorder %s32, 0
      %p80 = por %p78, %p79
      %s82 = sadd.s32 %s81, 1
      %p85 = scmp.eq.s32.totalorder %s26, 1
      %p86 = scmp.ne.s32.totalorder %s81, %s83
      %p87 = scmp.eq.s32.totalorder %s26, 0
      %p88 = por %p86, %p87
      %p89 = scmp.ne.s32.totalorder %s81, %s83
      %p90 = scmp.eq.s32.totalorder %s31, 1
      %p91 = por %p89, %p90
      %p92 = scmp.ne.s32.totalorder %s83, %s84
      %p93 = scmp.eq.s32.totalorder %s31, 0
      %p94 = por %p92, %p93
      %p95 = scmp.ne.s32.totalorder %s83, %s84
      %p96 = scmp.eq.s32.totalorder %s32, 1
      %p97 = por %p95, %p96
      %p99 = scmp.ne.s32.totalorder %s84, %s98
      %p100 = scmp.eq.s32.totalorder %s32, 0
      %p101 = por %p99, %p100
      %s103 = sadd.s32 %s102, 1
      %p106 = scmp.eq.s32.totalorder %s26, 1
      %p107 = scmp.ne.s32.totalorder %s102, %s104
      %p108 = scmp.eq.s32.totalorder %s26, 0
      %p109 = por %p107, %p108
      %p110 = scmp.ne.s32.totalorder %s102, %s104
      %p111 = scmp.eq.s32.totalorder %s31, 1
      %p112 = por %p110, %p111
      %p113 = scmp.ne.s32.totalorder %s104, %s105
      %p114 = scmp.eq.s32.totalorder %s31, 0
      %p115 = por %p113, %p114
      %p116 = scmp.ne.s32.totalorder %s104, %s105
      %p117 = scmp.eq.s32.totalorder %s32, 1
      %p118 = por %p116, %p117
      %p120 = scmp.ne.s32.totalorder %s105, %s119
      %p121 = scmp.eq.s32.totalorder %s32, 0
      %p122 = por %p120, %p121
      %s124 = sadd.s32 %s123, 1
      %p127 = scmp.eq.s32.totalorder %s26, 1
      %p128 = scmp.ne.s32.totalorder %s123, %s125
      %p129 = scmp.eq.s32.totalorder %s26, 0
      %p130 = por %p128, %p129
      %p131 = scmp.ne.s32.totalorder %s123, %s125
      %p132 = scmp.eq.s32.totalorder %s31, 1
      %p133 = por %p131, %p132
      %p134 = scmp.ne.s32.totalorder %s125, %s126
      %p135 = scmp.eq.s32.totalorder %s31, 0
      %p136 = por %p134, %p135
      %p137 = scmp.ne.s32.totalorder %s125, %s126
      %p138 = scmp.eq.s32.totalorder %s32, 1
      %p139 = por %p137, %p138
      %p141 = scmp.ne.s32.totalorder %s126, %s140
      %p142 = scmp.eq.s32.totalorder %s32, 0
      %p143 = por %p141, %p142
      %s145 = sadd.s32 %s144, 1
      %p148 = scmp.eq.s32.totalorder %s26, 1
      %p149 = scmp.ne.s32.totalorder %s144, %s146
      %p150 = scmp.eq.s32.totalorder %s26, 0
      %p151 = por %p149, %p150
      %p152 = scmp.ne.s32.totalorder %s144, %s146
      %p153 = scmp.eq.s32.totalorder %s31, 1
      %p154 = por %p152, %p153
      %p155 = scmp.ne.s32.totalorder %s146, %s147
      %p156 = scmp.eq.s32.totalorder %s31, 0
      %p157 = por %p155, %p156
      %p158 = scmp.ne.s32.totalorder %s146, %s147
      %p159 = scmp.eq.s32.totalorder %s32, 1
      %p160 = por %p158, %p159
      %p162 = scmp.ne.s32.totalorder %s147, %s161
      %p163 = scmp.eq.s32.totalorder %s32, 0
      %p164 = por %p162, %p163
      %s166 = sadd.s32 %s165, 1
      %p169 = scmp.eq.s32.totalorder %s26, 1
      %p170 = scmp.ne.s32.totalorder %s165, %s167
      %p171 = scmp.eq.s32.totalorder %s26, 0
      %p172 = por %p170, %p171
      %p173 = scmp.ne.s32.totalorder %s165, %s167
      %p174 = scmp.eq.s32.totalorder %s31, 1
      %p175 = por %p173, %p174
      %p176 = scmp.ne.s32.totalorder %s167, %s168
      %p177 = scmp.eq.s32.totalorder %s31, 0
      %p178 = por %p176, %p177
      %p179 = scmp.ne.s32.totalorder %s167, %s168
      %p180 = scmp.eq.s32.totalorder %s32, 1
      %p181 = por %p179, %p180
      %p183 = scmp.ne.s32.totalorder %s168, %s182
      %p184 = scmp.eq.s32.totalorder %s32, 0
      %p185 = por %p183, %p184
      %s187 = sadd.s32 %s186, 1
      %p190 = scmp.eq.s32.totalorder %s26, 1
      %p191 = scmp.ne.s32.totalorder %s186, %s188
      %p192 = scmp.eq.s32.totalorder %s26, 0
      %p193 = por %p191, %p192
      %p194 = scmp.ne.s32.totalorder %s186, %s188
      %p195 = scmp.eq.s32.totalorder %s31, 1
      %p196 = por %p194, %p195
      %p197 = scmp.ne.s32.totalorder %s188, %s189
      %p198 = scmp.eq.s32.totalorder %s31, 0
      %p199 = por %p197, %p198
      %p200 = scmp.ne.s32.totalorder %s188, %s189
      %p201 = scmp.eq.s32.totalorder %s32, 1
      %p202 = por %p200, %p201
      %p204 = scmp.ne.s32.totalorder %s189, %s203
      %p205 = scmp.eq.s32.totalorder %s32, 0
      %p206 = por %p204, %p205
      %s208 = sadd.s32 %s207, 1
      %p211 = scmp.eq.s32.totalorder %s26, 1
      %p212 = scmp.ne.s32.totalorder %s207, %s209
      %p213 = scmp.eq.s32.totalorder %s26, 0
      %p214 = por %p212, %p213
      %p215 = scmp.ne.s32.totalorder %s207, %s209
      %p216 = scmp.eq.s32.totalorder %s31, 1
      %p217 = por %p215, %p216
      %p218 = scmp.ne.s32.totalorder %s209, %s210
      %p219 = scmp.eq.s32.totalorder %s31, 0
      %p220 = por %p218, %p219
      %p221 = scmp.ne.s32.totalorder %s209, %s210
      %p222 = scmp.eq.s32.totalorder %s32, 1
      %p223 = por %p221, %p222
      %p225 = scmp.ne.s32.totalorder %s210, %s224
      %p226 = scmp.eq.s32.totalorder %s32, 0
      %p227 = por %p225, %p226
      %s229 = sadd.s32 %s228, 1
      %p232 = scmp.eq.s32.totalorder %s26, 1
      %p233 = scmp.ne.s32.totalorder %s228, %s230
      %p234 = scmp.eq.s32.totalorder %s26, 0
      %p235 = por %p233, %p234
      %p236 = scmp.ne.s32.totalorder %s228, %s230
      %p237 = scmp.eq.s32.totalorder %s31, 1
      %p238 = por %p236, %p237
      %p239 = scmp.ne.s32.totalorder %s230, %s231
      %p240 = scmp.eq.s32.totalorder %s31, 0
      %p241 = por %p239, %p240
      %p242 = scmp.ne.s32.totalorder %s230, %s231
      %p243 = scmp.eq.s32.totalorder %s32, 1
      %p244 = por %p242, %p243
      %p246 = scmp.ne.s32.totalorder %s231, %s245
      %p247 = scmp.eq.s32.totalorder %s32, 0
      %p248 = por %p246, %p247
      %s250 = sadd.s32 %s249, 1
      %p253 = scmp.eq.s32.totalorder %s26, 1
      %p254 = scmp.ne.s32.totalorder %s249, %s251
      %p255 = scmp.eq.s32.totalorder %s26, 0
      %p256 = por %p254, %p255
      %p257 = scmp.ne.s32.totalorder %s249, %s251
      %p258 = scmp.eq.s32.totalorder %s31, 1
      %p259 = por %p257, %p258
      %p260 = scmp.ne.s32.totalorder %s251, %s252
      %p261 = scmp.eq.s32.totalorder %s31, 0
      %p262 = por %p260, %p261
      %p263 = scmp.ne.s32.totalorder %s251, %s252
      %p264 = scmp.eq.s32.totalorder %s32, 1
      %p265 = por %p263, %p264
      %p267 = scmp.ne.s32.totalorder %s252, %s266
      %p268 = scmp.eq.s32.totalorder %s32, 0
      %p269 = por %p267, %p268
      %s271 = sadd.s32 %s270, 1
      %p274 = scmp.eq.s32.totalorder %s26, 1
      %p275 = scmp.ne.s32.totalorder %s270, %s272
      %p276 = scmp.eq.s32.totalorder %s26, 0
      %p277 = por %p275, %p276
      %p278 = scmp.ne.s32.totalorder %s270, %s272
      %p279 = scmp.eq.s32.totalorder %s31, 1
      %p280 = por %p278, %p279
      %p281 = scmp.ne.s32.totalorder %s272, %s273
      %p282 = scmp.eq.s32.totalorder %s31, 0
      %p283 = por %p281, %p282
      %p284 = scmp.ne.s32.totalorder %s272, %s273
      %p285 = scmp.eq.s32.totalorder %s32, 1
      %p286 = por %p284, %p285
      %p288 = scmp.ne.s32.totalorder %s273, %s287
      %p289 = scmp.eq.s32.totalorder %s32, 0
      %p290 = por %p288, %p289
      %s291 = ssub.s32 %s26, %s33
      %p292 = scmp.eq.s32.totalorder %s291, 0
      %s294 = sadd.s32 %s293, 1
      %s295 = scalar_select %p292, %s293, %s294
      %p298 = pneg %p292
      %p299 = scmp.eq.s32.totalorder %s26, 1
      %p300 = por %p298, %p299
      %p301 = scmp.ne.s32.totalorder %s293, %s296
      %p302 = scmp.eq.s32.totalorder %s26, 0
      %p303 = por %p301, %p302
      %p304 = scmp.ne.s32.totalorder %s293, %s296
      %p305 = scmp.eq.s32.totalorder %s31, 1
      %p306 = por %p304, %p305
      %p307 = scmp.ne.s32.totalorder %s296, %s297
      %p308 = scmp.eq.s32.totalorder %s31, 0
      %p309 = por %p307, %p308
      %p310 = scmp.ne.s32.totalorder %s296, %s297
      %p311 = scmp.eq.s32.totalorder %s32, 1
      %p312 = por %p310, %p311
      %p314 = scmp.ne.s32.totalorder %s297, %s313
      %p315 = scmp.eq.s32.totalorder %s32, 0
      %p316 = por %p314, %p315
      %p317 = scmp.le.s32.totalorder 1, %s26
      %p318 = scmp.lt.s32.totalorder %s26, 3
      %p319 = pnand %p317, %p318
      %p320 = pneg %p319
      // Predicated region
      $region9: #{tpu_custom_call.1} parent=5 // pred_check
        _
      $region10: #{tpu_custom_call.1} parent=5 // pred_check_branch
        %322 = sbr.rel (%p319) target = $region12
      $region11: #{tpu_custom_call.1} parent=5 // pred_region
        %s323 = ssub.s32 %s26, 1
        // Predicated region
        $region13: #{tpu_custom_call.1} parent=11 // pred_check
          %p324 = pneg %p73
        $region14: #{tpu_custom_call.1} parent=11 // pred_check_branch
          %326 = sbr.rel (%p324) target = $region16
        $region15: #{tpu_custom_call.1} parent=11 // pred_region
          _
        $region16: #{tpu_custom_call.1} parent=11 // pred_fallthru
          _
        // Predicated region
        $region17: #{tpu_custom_call.1} parent=11 // pred_check
          %p327 = pneg %p94
        $region18: #{tpu_custom_call.1} parent=11 // pred_check_branch
          %329 = sbr.rel (%p327) target = $region20
        $region19: #{tpu_custom_call.1} parent=11 // pred_region
          _
        $region20: #{tpu_custom_call.1} parent=11 // pred_fallthru
          _
        // Predicated region
        $region21: #{tpu_custom_call.1} parent=11 // pred_check
          %p330 = pneg %p115
        $region22: #{tpu_custom_call.1} parent=11 // pred_check_branch
          %332 = sbr.rel (%p330) target = $region24
        $region23: #{tpu_custom_call.1} parent=11 // pred_region
          _
        $region24: #{tpu_custom_call.1} parent=11 // pred_fallthru
          _
        // Predicated region
        $region25: #{tpu_custom_call.1} parent=11 // pred_check
          %p333 = pneg %p136
        $region26: #{tpu_custom_call.1} parent=11 // pred_check_branch
          %335 = sbr.rel (%p333) target = $region28
        $region27: #{tpu_custom_call.1} parent=11 // pred_region
          _
        $region28: #{tpu_custom_call.1} parent=11 // pred_fallthru
          _
        // Predicated region
        $region29: #{tpu_custom_call.1} parent=11 // pred_check
          %p336 = pneg %p157
        $region30: #{tpu_custom_call.1} parent=11 // pred_check_branch
          %338 = sbr.rel (%p336) target = $region32
        $region31: #{tpu_custom_call.1} parent=11 // pred_region
          _
        $region32: #{tpu_custom_call.1} parent=11 // pred_fallthru
          _
        // Predicated region
        $region33: #{tpu_custom_call.1} parent=11 // pred_check
          %p339 = pneg %p178
        $region34: #{tpu_custom_call.1} parent=11 // pred_check_branch
          %341 = sbr.rel (%p339) target = $region36
        $region35: #{tpu_custom_call.1} parent=11 // pred_region
          _
        $region36: #{tpu_custom_call.1} parent=11 // pred_fallthru
          _
        // Predicated region
        $region37: #{tpu_custom_call.1} parent=11 // pred_check
          %p342 = pneg %p199
        $region38: #{tpu_custom_call.1} parent=11 // pred_check_branch
          %344 = sbr.rel (%p342) target = $region40
        $region39: #{tpu_custom_call.1} parent=11 // pred_region
          _
        $region40: #{tpu_custom_call.1} parent=11 // pred_fallthru
          _
        // Predicated region
        $region41: #{tpu_custom_call.1} parent=11 // pred_check
          %p345 = pneg %p220
        $region42: #{tpu_custom_call.1} parent=11 // pred_check_branch
          %347 = sbr.rel (%p345) target = $region44
        $region43: #{tpu_custom_call.1} parent=11 // pred_region
          %349 = vsyncadd [#allocation6], 0
          %s350 = sshll.u32 %s8, 4
          %s351 = int_to_ptr.hbm [resolvable:$true] %s350
          %s352 = sshll.u32 [#allocation5], 4
          %s353 = int_to_ptr.vmem [resolvable:$true] %s352
          %358 = dma.hbm_to_vmem [thread:$0]  %s351, 8192, %s353, [#allocation6], 256, 256, 16
        $region44: #{tpu_custom_call.1} parent=11 // pred_fallthru
          _
        // Predicated region
        $region45: #{tpu_custom_call.1} parent=11 // pred_check
          %p359 = pneg %p241
        $region46: #{tpu_custom_call.1} parent=11 // pred_check_branch
          %361 = sbr.rel (%p359) target = $region48
        $region47: #{tpu_custom_call.1} parent=11 // pred_region
          %363 = vsyncadd [#allocation6], 0
          %s364 = sshll.u32 %s9, 4
          %s365 = int_to_ptr.hbm [resolvable:$true] %s364
          %s366 = sshll.u32 [#allocation7], 4
          %s367 = int_to_ptr.vmem [resolvable:$true] %s366
          %372 = dma.hbm_to_vmem [thread:$0]  %s365, 8192, %s367, [#allocation6], 256, 256, 16
        $region48: #{tpu_custom_call.1} parent=11 // pred_fallthru
          _
        // Predicated region
        $region49: #{tpu_custom_call.1} parent=11 // pred_check
          %p373 = pneg %p262
        $region50: #{tpu_custom_call.1} parent=11 // pred_check_branch
          %375 = sbr.rel (%p373) target = $region52
        $region51: #{tpu_custom_call.1} parent=11 // pred_region
          %377 = vsyncadd [#allocation9], 0
          %s378 = sshll.u32 %s10, 4
          %s379 = int_to_ptr.hbm [resolvable:$true] %s378
          %s380 = sshll.u32 [#allocation8], 4
          %s381 = int_to_ptr.vmem [resolvable:$true] %s380
          %386 = dma.hbm_to_vmem [thread:$0]  %s379, 4096, %s381, [#allocation9], 128, 128, 8
        $region52: #{tpu_custom_call.1} parent=11 // pred_fallthru
          _
        // Predicated region
        $region53: #{tpu_custom_call.1} parent=11 // pred_check
          %p387 = pneg %p283
        $region54: #{tpu_custom_call.1} parent=11 // pred_check_branch
          %389 = sbr.rel (%p387) target = $region56
        $region55: #{tpu_custom_call.1} parent=11 // pred_region
          %391 = vsyncadd [#allocation9], 0
          %s392 = sshll.u32 %s11, 4
          %s393 = int_to_ptr.hbm [resolvable:$true] %s392
          %s394 = sshll.u32 [#allocation10], 4
          %s395 = int_to_ptr.vmem [resolvable:$true] %s394
          %400 = dma.hbm_to_vmem [thread:$0]  %s393, 4096, %s395, [#allocation9], 128, 128, 8
        $region56: #{tpu_custom_call.1} parent=11 // pred_fallthru
          _
      $region12: #{tpu_custom_call.1} parent=5 // pred_fallthru
        _
      %p401 = scmp.lt.s32.totalorder %s26, 2
      // Predicated region
      $region57: #{tpu_custom_call.1} parent=5 // pred_check
        %p402 = pneg %p401
      $region58: #{tpu_custom_call.1} parent=5 // pred_check_branch
        %404 = sbr.rel (%p402) target = $region60
      $region59: #{tpu_custom_call.1} parent=5 // pred_region
        // Predicated region
        $region61: #{tpu_custom_call.1} parent=59 // pred_check
          %p405 = pneg %p46
        $region62: #{tpu_custom_call.1} parent=59 // pred_check_branch
          %407 = sbr.rel (%p405) target = $region64
        $region63: #{tpu_custom_call.1} parent=59 // pred_region
          %s408 = sand.u32 %s36, 1
          %s409 = scalar_lea.sflag [#allocation3], %s408
          %s410 = sand.u32 %s36, 1
          %s411 = smul.addr %s410, 64
          %s412 = scalar_lea.vmem [#allocation2], %s411
          %414 = vsyncadd %s409, 0
          %s415 = smul.addr %s26, 8
          %s416 = smul.addr %s415, 8
          %s417 = scalar_lea.hbm %s0, %s416
          %s418 = sshll.u32 %s417, 4
          %s419 = int_to_ptr.hbm [resolvable:$true] %s418
          %s420 = sshll.u32 %s412, 4
          %s421 = int_to_ptr.vmem [resolvable:$true] %s420
          %426 = dma.hbm_to_vmem [thread:$0]  %s419, 1024, %s421, %s409, 256, 256, 16
        $region64: #{tpu_custom_call.1} parent=59 // pred_fallthru
          _
      $region60: #{tpu_custom_call.1} parent=5 // pred_fallthru
        _
      %p427 = scmp.le.s32.totalorder 1, %s26
      %p428 = scmp.lt.s32.totalorder %s26, 3
      %p429 = pnand %p427, %p428
      %p430 = pneg %p429
      // Predicated region
      $region65: #{tpu_custom_call.1} parent=5 // pred_check
        _
      $region66: #{tpu_custom_call.1} parent=5 // pred_check_branch
        %432 = sbr.rel (%p429) target = $region68
      $region67: #{tpu_custom_call.1} parent=5 // pred_region
        %s433 = ssub.s32 %s26, 1
        %s434 = sand.u32 %s39, 1
        %s435 = scalar_lea.sflag [#allocation3], %s434
        %s436 = sand.u32 %s39, 1
        %s437 = smul.addr %s436, 64
        %s438 = scalar_lea.vmem [#allocation2], %s437
        // Predicated region
        $region69: #{tpu_custom_call.1} parent=67 // pred_check
          %p439 = pneg %p52
        $region70: #{tpu_custom_call.1} parent=67 // pred_check_branch
          %441 = sbr.rel (%p439) target = $region72
        $region71: #{tpu_custom_call.1} parent=67 // pred_region
          %443 = dma.done %s435, 1024
        $region72: #{tpu_custom_call.1} parent=67 // pred_fallthru
          _
        // Predicated region
        $region73: #{tpu_custom_call.1} parent=67 // pred_check
          %p444 = pneg %p220
        $region74: #{tpu_custom_call.1} parent=67 // pred_check_branch
          %446 = sbr.rel (%p444) target = $region76
        $region75: #{tpu_custom_call.1} parent=67 // pred_region
          %448 = dma.done [#allocation6], 8192
        $region76: #{tpu_custom_call.1} parent=67 // pred_fallthru
          _
        // Predicated region
        $region77: #{tpu_custom_call.1} parent=67 // pred_check
          %p449 = pneg %p241
        $region78: #{tpu_custom_call.1} parent=67 // pred_check_branch
          %451 = sbr.rel (%p449) target = $region80
        $region79: #{tpu_custom_call.1} parent=67 // pred_region
          %453 = dma.done [#allocation6], 8192
        $region80: #{tpu_custom_call.1} parent=67 // pred_fallthru
          _
        // Predicated region
        $region81: #{tpu_custom_call.1} parent=67 // pred_check
          %p454 = pneg %p262
        $region82: #{tpu_custom_call.1} parent=67 // pred_check_branch
          %456 = sbr.rel (%p454) target = $region84
        $region83: #{tpu_custom_call.1} parent=67 // pred_region
          %458 = dma.done [#allocation9], 4096
        $region84: #{tpu_custom_call.1} parent=67 // pred_fallthru
          _
        // Predicated region
        $region85: #{tpu_custom_call.1} parent=67 // pred_check
          %p459 = pneg %p283
        $region86: #{tpu_custom_call.1} parent=67 // pred_check_branch
          %461 = sbr.rel (%p459) target = $region88
        $region87: #{tpu_custom_call.1} parent=67 // pred_region
          %463 = dma.done [#allocation9], 4096
        $region88: #{tpu_custom_call.1} parent=67 // pred_fallthru
          _
        %s464 = sand.u32 %s39, 1
        %s465 = scalar_lea.sflag [#allocation3], %s464
        %s466 = sand.u32 %s39, 1
        %s467 = smul.addr %s466, 64
        %s468 = scalar_lea.vmem [#allocation2], %s467
        %p469 = pneg %p52
        %p470 = pneg %p49
        %p471 = pneg %p73
        %p472 = pneg %p70
        %p473 = pneg %p94
        %p474 = pneg %p91
        %p475 = pneg %p115
        %p476 = pneg %p112
        %p477 = pneg %p136
        %p478 = pneg %p133
        %p479 = pneg %p157
        %p480 = pneg %p154
        %p481 = pneg %p178
        %p482 = pneg %p175
        %p483 = pneg %p199
        %p484 = pneg %p196
        %p485 = pneg %p220
        %p486 = pneg %p217
        %p487 = pneg %p241
        %p488 = pneg %p238
        %p489 = pneg %p262
        %p490 = pneg %p259
        %p491 = pneg %p283
        %p492 = pneg %p280
        %p493 = pneg %p309
        %p494 = pneg %p306
        %s495 = sand.u32 %s296, 1
        %s496 = scalar_lea.sflag [#allocation4], %s495
        %s497 = sand.u32 %s296, 1
        %s498 = smul.addr %s497, 64
        %s499 = scalar_lea.vmem [#allocation11], %s498
        %v500 = vld [vmem:[%s438] sm:$0xff]
        %v501 = vld [vmem:[%s438 + $0x8] sm:$0xff]
        %v502 = vld [vmem:[%s438 + $0x10] sm:$0xff]
        %v503 = vld [vmem:[%s438 + $0x18] sm:$0xff]
        %v504 = vld [vmem:[%s438 + $0x20] sm:$0xff]
        %v505 = vld [vmem:[%s438 + $0x28] sm:$0xff]
        %v506 = vld [vmem:[%s438 + $0x30] sm:$0xff]
        %v507 = vld [vmem:[%s438 + $0x38] sm:$0xff]
        %v508 = vadd.f32 %v500, %v501
        %509 = vadd.xlane.f32.xlu0 %v508
        %v510 = vpop.xlane.xlu0 %509
        %v511 = vadd.f32 %v502, %v503
        %512 = vadd.xlane.f32.xlu0 %v511
        %v513 = vpop.xlane.xlu0 %512
        %v514 = vadd.f32 %v504, %v505
        %515 = vadd.xlane.f32.xlu0 %v514
        %v516 = vpop.xlane.xlu0 %515
        %v517 = vadd.f32 %v506, %v507
        %518 = vadd.xlane.f32.xlu0 %v517
        %v519 = vpop.xlane.xlu0 %518
        %v520 = vmul.f32 %v510, 0.00390625
        %v521 = vmul.f32 %v513, 0.00390625
        %v522 = vmul.f32 %v516, 0.00390625
        %v523 = vmul.f32 %v519, 0.00390625
        %v524 = vmax.f32 %v500, %v501
        %525 = vmax.xlane.f32.xlu0 %v524
        %v526 = vpop.xlane.xlu0 %525
        %v527 = vmax.f32 %v502, %v503
        %528 = vmax.xlane.f32.xlu0 %v527
        %v529 = vpop.xlane.xlu0 %528
        %v530 = vmax.f32 %v504, %v505
        %531 = vmax.xlane.f32.xlu0 %v530
        %v532 = vpop.xlane.xlu0 %531
        %v533 = vmax.f32 %v506, %v507
        %534 = vmax.xlane.f32.xlu0 %v533
        %v535 = vpop.xlane.xlu0 %534
        %v540 = vlaneseq
        %v541 = vand.u32 %v540, 127
        %v542 = vperm.slane %v520, %v541
        %v543 = vadd.s32 %v541, 4294967288
        %v544 = vperm.slane %v521, %v543
        %vm545 = vcmask 130112
        %v546 = vsel %vm545, %v544, %v542
        %v547 = vadd.s32 %v541, 4294967280
        %v548 = vperm.slane %v522, %v547
        %vm549 = vcmask 195712
        %v550 = vsel %vm549, %v548, %v546
        %v551 = vadd.s32 %v541, 4294967272
        %v552 = vperm.slane %v523, %v551
        %vm553 = vcmask 261312
        %v554 = vsel %vm553, %v552, %v550
        %v560 = vperm.slane %v526, %v541
        %v561 = vperm.slane %v529, %v543
        %v562 = vsel %vm545, %v561, %v560
        %v563 = vperm.slane %v532, %v547
        %v564 = vsel %vm549, %v563, %v562
        %v565 = vperm.slane %v535, %v551
        %v566 = vsel %vm553, %v565, %v564
        %vm568 = vcmask 1040384
        %v569 = vsel %vm568, %v554, %v566
        %v570 = vld [vmem:[%s1] sm:$0xff]
        %v571 = vld [vmem:[%s1 + $0x8] sm:$0xff]
        %v572 = vld [vmem:[%s1 + $0x10] sm:$0xff]
        %v573 = vld [vmem:[%s1 + $0x18] sm:$0xff]
        %vm574 = vcmask 261120
        %v576 = vsel %vm574, %v569, 0
        %578 = vmatpush.msra.mxu0 0.0
        %579 = vmatpush.msra.mxu0 0.0
        %580 = vmatpush.msra.mxu0 0.0
        %581 = vmatpush.msra.mxu0 0.0
        %582 = vmatpush.msra.mxu0 0.0
        %583 = vmatpush.msra.mxu0 0.0
        %584 = vmatpush.msra.mxu0 0.0
        %585 = vmatpush.msra.mxu0 0.0
        %586 = vmatpush.msra.mxu0 0.0
        %587 = vmatpush.msra.mxu0 0.0
        %588 = vmatpush.msra.mxu0 0.0
        %589 = vmatpush.msra.mxu0 0.0
        %590 = vmatpush.msra.mxu0 %v573
        %591 = vmatpush.msra.mxu0 %v572
        %592 = vmatpush.msra.mxu0 %v571
        %593 = vmatpush.msra.mxu0 %v570
        %594 = vmatmul.f32.gmra.mxu0 %v576
        %v595 = vpop.f32.mrf.mxu0
        %v596 = vadd.f32 0.0, %v595
        %597 = vdwg.mxu0
        %v598 = vmax.f32 %v596, 0.0
        %v599 = vld [vmem:[%s2] sm:$0x3]
        %vm600 = vcmask 15360
        %v602 = vsel %vm600, %v598, 0
        %vm604 = vcmask 1041408
        %v606 = vsel %vm604, %v599, 0
        %608 = vmatpush.msra.mxu0 0.0
        %609 = vmatpush.msra.mxu0 0.0
        %610 = vmatpush.msra.mxu0 0.0
        %611 = vmatpush.msra.mxu0 0.0
        %612 = vmatpush.msra.mxu0 0.0
        %613 = vmatpush.msra.mxu0 0.0
        %614 = vmatpush.msra.mxu0 0.0
        %615 = vmatpush.msra.mxu0 0.0
        %616 = vmatpush.msra.mxu0 0.0
        %617 = vmatpush.msra.mxu0 0.0
        %618 = vmatpush.msra.mxu0 0.0
        %619 = vmatpush.msra.mxu0 0.0
        %620 = vmatpush.msra.mxu0 0.0
        %621 = vmatpush.msra.mxu0 0.0
        %622 = vmatpush.msra.mxu0 0.0
        %623 = vmatpush.msra.mxu0 %v606
        %624 = vmatmul.f32.gmra.mxu0 %v602
        %v625 = vpop.f32.mrf.mxu0
        %v626 = vadd.f32 0.0, %v625
        %627 = vdwg.mxu0
        %v628 = vld [vmem:[%s3] sm:$0xff]
        %v629 = vld [vmem:[%s3 + $0x8] sm:$0xff]
        %v630 = vld [vmem:[%s3 + $0x10] sm:$0xff]
        %v631 = vld [vmem:[%s3 + $0x18] sm:$0xff]
        %v632 = vld [vmem:[%s4] sm:$0xff]
        %v633 = vld [vmem:[%s4 + $0x8] sm:$0xff]
        %v634 = vld [vmem:[%s4 + $0x10] sm:$0xff]
        %v635 = vld [vmem:[%s4 + $0x18] sm:$0xff]
        %v636 = vsel %vm574, %v566, 0
        %638 = vmatpush.msra.mxu0 0.0
        %639 = vmatpush.msra.mxu0 0.0
        %640 = vmatpush.msra.mxu0 0.0
        %641 = vmatpush.msra.mxu0 0.0
        %642 = vmatpush.msra.mxu0 0.0
        %643 = vmatpush.msra.mxu0 0.0
        %644 = vmatpush.msra.mxu0 0.0
        %645 = vmatpush.msra.mxu0 0.0
        %646 = vmatpush.msra.mxu0 0.0
        %647 = vmatpush.msra.mxu0 0.0
        %648 = vmatpush.msra.mxu0 0.0
        %649 = vmatpush.msra.mxu0 0.0
        %650 = vmatpush.msra.mxu0 %v635
        %651 = vmatpush.msra.mxu0 %v634
        %652 = vmatpush.msra.mxu0 %v633
        %653 = vmatpush.msra.mxu0 %v632
        %654 = vmatmul.f32.gmra.mxu0 %v636
        %v655 = vpop.f32.mrf.mxu0
        %v656 = vadd.f32 0.0, %v655
        %657 = vdwg.mxu0
        %v658 = vsel %vm574, %v554, 0
        %660 = vmatpush.msra.mxu0 0.0
        %661 = vmatpush.msra.mxu0 0.0
        %662 = vmatpush.msra.mxu0 0.0
        %663 = vmatpush.msra.mxu0 0.0
        %664 = vmatpush.msra.mxu0 0.0
        %665 = vmatpush.msra.mxu0 0.0
        %666 = vmatpush.msra.mxu0 0.0
        %667 = vmatpush.msra.mxu0 0.0
        %668 = vmatpush.msra.mxu0 0.0
        %669 = vmatpush.msra.mxu0 0.0
        %670 = vmatpush.msra.mxu0 0.0
        %671 = vmatpush.msra.mxu0 0.0
        %672 = vmatpush.msra.mxu0 %v631
        %673 = vmatpush.msra.mxu0 %v630
        %674 = vmatpush.msra.mxu0 %v629
        %675 = vmatpush.msra.mxu0 %v628
        %676 = vmatmul.f32.gmra.mxu0 %v658
        %v677 = vpop.f32.mrf.mxu0
        %v678 = vadd.f32 %v656, %v677
        %679 = vdwg.mxu0
        %v680 = vld [vmem:[%s5] sm:$0x1]
        %v681 = vadd.f32 %v678, %v680
        %v682 = vmax.f32 %v681, 0.0
        %v683 = vld [vmem:[%s6] sm:$0x3]
        %v684 = vld [vmem:[%s7] sm:$0x1]
        %v686 = vsel %vm600, %v682, 0
        %v689 = vsel %vm604, %v683, 0
        %691 = vmatpush.msra.mxu0 0.0
        %692 = vmatpush.msra.mxu0 0.0
        %693 = vmatpush.msra.mxu0 0.0
        %694 = vmatpush.msra.mxu0 0.0
        %695 = vmatpush.msra.mxu0 0.0
        %696 = vmatpush.msra.mxu0 0.0
        %697 = vmatpush.msra.mxu0 0.0
        %698 = vmatpush.msra.mxu0 0.0
        %699 = vmatpush.msra.mxu0 0.0
        %700 = vmatpush.msra.mxu0 0.0
        %701 = vmatpush.msra.mxu0 0.0
        %702 = vmatpush.msra.mxu0 0.0
        %703 = vmatpush.msra.mxu0 0.0
        %704 = vmatpush.msra.mxu0 0.0
        %705 = vmatpush.msra.mxu0 0.0
        %706 = vmatpush.msra.mxu0 %v689
        %707 = vmatmul.f32.gmra.mxu0 %v686
        %v708 = vpop.f32.mrf.mxu0
        %v709 = vadd.f32 %v684, %v708
        %710 = vdwg.mxu0
        %v711 = vxor.u32 %v709, 2147483648
        %v712 = vmul.f32 %v711, 1.442695
        %v713 = vpow.pop %v712
        %v714 = vadd.f32 %v713, 1.0
        %v715 = vrcp.pop %v714
        %v716 = vmul.f32 %v714, %v715
        %v717 = vsub.f32 1.0, %v716
        %v718 = vmul.f32 %v715, %v717
        %v719 = vadd.f32 %v715, %v718
        %vm720 = vweird.f32 %v714
        %vm721 = vweird.f32 %v715
        %vm722 = vmor %vm720, %vm721
        %v723 = vsel %vm722, %v715, %v719
        %v724 = vand.u32 2147483647, %v714
        %vm725 = vcmp.eq.f32.partialorder %v724, 8.507059e+37
        %v726 = vand.u32 %v714, 2147483648
        %v727 = vor.u32 1.1754944e-38, %v726
        %v728 = vsel %vm725, %v727, %v723
        %v729 = vmul.f32 1.0, %v728
        %v730 = vmul.f32 %v729, %v626
        %v731 = vsub.f32 1.0, %v729
        %v733 = vrot.slane %v626, 1
        %v735 = vmul.f32 %v731, %v733
        %v736 = vadd.f32 %v730, %v735
        %v737 = vxor.u32 %v736, 2147483648
        %v738 = vmul.f32 %v737, 1.442695
        %v739 = vpow.pop %v738
        %v740 = vadd.f32 %v739, 1.0
        %v741 = vrcp.pop %v740
        %v742 = vmul.f32 %v740, %v741
        %v743 = vsub.f32 1.0, %v742
        %v744 = vmul.f32 %v741, %v743
        %v745 = vadd.f32 %v741, %v744
        %vm746 = vweird.f32 %v740
        %vm747 = vweird.f32 %v741
        %vm748 = vmor %vm746, %vm747
        %v749 = vsel %vm748, %v741, %v745
        %v750 = vand.u32 2147483647, %v740
        %vm751 = vcmp.eq.f32.partialorder %v750, 8.507059e+37
        %v752 = vand.u32 %v740, 2147483648
        %v753 = vor.u32 1.1754944e-38, %v752
        %v754 = vsel %vm751, %v753, %v749
        %v755 = vmul.f32 1.0, %v754
        %v756 = vperm.slane %v755, 0
        %v757 = vlaneseq
        %v758 = vshrl.u32 %v757, 7
        %760 = vset.pattern.permute.xlu0 %v758
        %761 = vperm.xlu0 %760, %v756
        %v762 = vpop.permute.xlu0 %761
        %v763 = vlaneseq
        %v764 = vshrl.u32 %v763, 7
        %v765 = vadd.s32 %v764, 8
        %766 = vset.pattern.permute.xlu0 %v765
        %767 = vperm.xlu0 %766, %v756
        %v768 = vpop.permute.xlu0 %767
        %v769 = vlaneseq
        %v770 = vshrl.u32 %v769, 7
        %v771 = vadd.s32 %v770, 16
        %772 = vset.pattern.permute.xlu0 %v771
        %773 = vperm.xlu0 %772, %v756
        %v774 = vpop.permute.xlu0 %773
        %v775 = vlaneseq
        %v776 = vshrl.u32 %v775, 7
        %v777 = vadd.s32 %v776, 24
        %778 = vset.pattern.permute.xlu0 %v777
        %779 = vperm.xlu0 %778, %v756
        %v780 = vpop.permute.xlu0 %779
        %v781 = vmul.f32 %v500, %v762
        %v782 = vmul.f32 %v501, %v762
        %v783 = vmul.f32 %v502, %v768
        %v784 = vmul.f32 %v503, %v768
        %v785 = vmul.f32 %v504, %v774
        %v786 = vmul.f32 %v505, %v774
        %v787 = vmul.f32 %v506, %v780
        %v788 = vmul.f32 %v507, %v780
        %v789 = vadd.f32 %v781, %v783
        %v790 = vadd.f32 %v789, %v785
        %v791 = vadd.f32 %v790, %v787
        %v792 = vrot.slane %v791, 4
        %v793 = vadd.f32 %v791, %v792
        %v794 = vrot.slane %v793, 2
        %v795 = vadd.f32 %v793, %v794
        %v796 = vrot.slane %v795, 1
        %v797 = vadd.f32 %v795, %v796
        %v798 = vadd.f32 %v782, %v784
        %v799 = vadd.f32 %v798, %v786
        %v800 = vadd.f32 %v799, %v788
        %v801 = vrot.slane %v800, 4
        %v802 = vadd.f32 %v800, %v801
        %v803 = vrot.slane %v802, 2
        %v804 = vadd.f32 %v802, %v803
        %v805 = vrot.slane %v804, 1
        %v806 = vadd.f32 %v804, %v805
        %v807 = vmul.f32 %v797, 0.03125
        %v808 = vmul.f32 %v806, 0.03125
        %v809 = vmax.f32 %v781, %v785
        %v810 = vmax.f32 %v783, %v787
        %v811 = vmax.f32 %v809, %v810
        %v812 = vrot.slane %v811, 4
        %v813 = vmax.f32 %v811, %v812
        %v814 = vrot.slane %v813, 2
        %v815 = vmax.f32 %v813, %v814
        %v816 = vrot.slane %v815, 1
        %v817 = vmax.f32 %v815, %v816
        %v818 = vmax.f32 %v782, %v786
        %v819 = vmax.f32 %v784, %v788
        %v820 = vmax.f32 %v818, %v819
        %v821 = vrot.slane %v820, 4
        %v822 = vmax.f32 %v820, %v821
        %v823 = vrot.slane %v822, 2
        %v824 = vmax.f32 %v822, %v823
        %v825 = vrot.slane %v824, 1
        %v826 = vmax.f32 %v824, %v825
        %v827 = vpack.c.bf16 %v807, %v807
        %v828 = vpack.c.bf16 %v808, %v808
        %v829 = vpack.c.bf16 %v817, %v817
        %v830 = vpack.c.bf16 %v826, %v826
        %v831 = vld [vmem:[#allocation5] sm:$0xff]
        %v832 = vld [vmem:[#allocation5 + $0x8] sm:$0xff]
        %v833 = vld [vmem:[#allocation5 + $0x10] sm:$0xff]
        %v834 = vld [vmem:[#allocation5 + $0x18] sm:$0xff]
        %v835 = vld [vmem:[#allocation5 + $0x20] sm:$0xff]
        %v836 = vld [vmem:[#allocation5 + $0x28] sm:$0xff]
        %v837 = vld [vmem:[#allocation5 + $0x30] sm:$0xff]
        %v838 = vld [vmem:[#allocation5 + $0x38] sm:$0xff]
        %v839 = vld [vmem:[#allocation5 + $0x40] sm:$0xff]
        %v840 = vld [vmem:[#allocation5 + $0x48] sm:$0xff]
        %v841 = vld [vmem:[#allocation5 + $0x50] sm:$0xff]
        %v842 = vld [vmem:[#allocation5 + $0x58] sm:$0xff]
        %v843 = vld [vmem:[#allocation5 + $0x60] sm:$0xff]
        %v844 = vld [vmem:[#allocation5 + $0x68] sm:$0xff]
        %v845 = vld [vmem:[#allocation5 + $0x70] sm:$0xff]
        %v846 = vld [vmem:[#allocation5 + $0x78] sm:$0xff]
        %v847 = vld [vmem:[#allocation5 + $0x80] sm:$0xff]
        %v848 = vld [vmem:[#allocation5 + $0x88] sm:$0xff]
        %v849 = vld [vmem:[#allocation5 + $0x90] sm:$0xff]
        %v850 = vld [vmem:[#allocation5 + $0x98] sm:$0xff]
        %v851 = vld [vmem:[#allocation5 + $0xa0] sm:$0xff]
        %v852 = vld [vmem:[#allocation5 + $0xa8] sm:$0xff]
        %v853 = vld [vmem:[#allocation5 + $0xb0] sm:$0xff]
        %v854 = vld [vmem:[#allocation5 + $0xb8] sm:$0xff]
        %v855 = vld [vmem:[#allocation5 + $0xc0] sm:$0xff]
        %v856 = vld [vmem:[#allocation5 + $0xc8] sm:$0xff]
        %v857 = vld [vmem:[#allocation5 + $0xd0] sm:$0xff]
        %v858 = vld [vmem:[#allocation5 + $0xd8] sm:$0xff]
        %v859 = vld [vmem:[#allocation5 + $0xe0] sm:$0xff]
        %v860 = vld [vmem:[#allocation5 + $0xe8] sm:$0xff]
        %v861 = vld [vmem:[#allocation5 + $0xf0] sm:$0xff]
        %v862 = vld [vmem:[#allocation5 + $0xf8] sm:$0xff]
        %v863 = vld [vmem:[#allocation5 + $0x100] sm:$0xff]
        %v864 = vld [vmem:[#allocation5 + $0x108] sm:$0xff]
        %v865 = vld [vmem:[#allocation5 + $0x110] sm:$0xff]
        %v866 = vld [vmem:[#allocation5 + $0x118] sm:$0xff]
        %v867 = vld [vmem:[#allocation5 + $0x120] sm:$0xff]
        %v868 = vld [vmem:[#allocation5 + $0x128] sm:$0xff]
        %v869 = vld [vmem:[#allocation5 + $0x130] sm:$0xff]
        %v870 = vld [vmem:[#allocation5 + $0x138] sm:$0xff]
        %v871 = vld [vmem:[#allocation5 + $0x140] sm:$0xff]
        %v872 = vld [vmem:[#allocation5 + $0x148] sm:$0xff]
        %v873 = vld [vmem:[#allocation5 + $0x150] sm:$0xff]
        %v874 = vld [vmem:[#allocation5 + $0x158] sm:$0xff]
        %v875 = vld [vmem:[#allocation5 + $0x160] sm:$0xff]
        %v876 = vld [vmem:[#allocation5 + $0x168] sm:$0xff]
        %v877 = vld [vmem:[#allocation5 + $0x170] sm:$0xff]
        %v878 = vld [vmem:[#allocation5 + $0x178] sm:$0xff]
        %v879 = vld [vmem:[#allocation5 + $0x180] sm:$0xff]
        %v880 = vld [vmem:[#allocation5 + $0x188] sm:$0xff]
        %v881 = vld [vmem:[#allocation5 + $0x190] sm:$0xff]
        %v882 = vld [vmem:[#allocation5 + $0x198] sm:$0xff]
        %v883 = vld [vmem:[#allocation5 + $0x1a0] sm:$0xff]
        %v884 = vld [vmem:[#allocation5 + $0x1a8] sm:$0xff]
        %v885 = vld [vmem:[#allocation5 + $0x1b0] sm:$0xff]
        %v886 = vld [vmem:[#allocation5 + $0x1b8] sm:$0xff]
        %v887 = vld [vmem:[#allocation5 + $0x1c0] sm:$0xff]
        %v888 = vld [vmem:[#allocation5 + $0x1c8] sm:$0xff]
        %v889 = vld [vmem:[#allocation5 + $0x1d0] sm:$0xff]
        %v890 = vld [vmem:[#allocation5 + $0x1d8] sm:$0xff]
        %v891 = vld [vmem:[#allocation5 + $0x1e0] sm:$0xff]
        %v892 = vld [vmem:[#allocation5 + $0x1e8] sm:$0xff]
        %v893 = vld [vmem:[#allocation5 + $0x1f0] sm:$0xff]
        %v894 = vld [vmem:[#allocation5 + $0x1f8] sm:$0xff]
        %v895 = vld [vmem:[#allocation7] sm:$0xff]
        %v896 = vld [vmem:[#allocation7 + $0x8] sm:$0xff]
        %v897 = vld [vmem:[#allocation7 + $0x10] sm:$0xff]
        %v898 = vld [vmem:[#allocation7 + $0x18] sm:$0xff]
        %v899 = vld [vmem:[#allocation7 + $0x20] sm:$0xff]
        %v900 = vld [vmem:[#allocation7 + $0x28] sm:$0xff]
        %v901 = vld [vmem:[#allocation7 + $0x30] sm:$0xff]
        %v902 = vld [vmem:[#allocation7 + $0x38] sm:$0xff]
        %v903 = vld [vmem:[#allocation7 + $0x40] sm:$0xff]
        %v904 = vld [vmem:[#allocation7 + $0x48] sm:$0xff]
        %v905 = vld [vmem:[#allocation7 + $0x50] sm:$0xff]
        %v906 = vld [vmem:[#allocation7 + $0x58] sm:$0xff]
        %v907 = vld [vmem:[#allocation7 + $0x60] sm:$0xff]
        %v908 = vld [vmem:[#allocation7 + $0x68] sm:$0xff]
        %v909 = vld [vmem:[#allocation7 + $0x70] sm:$0xff]
        %v910 = vld [vmem:[#allocation7 + $0x78] sm:$0xff]
        %v911 = vld [vmem:[#allocation7 + $0x80] sm:$0xff]
        %v912 = vld [vmem:[#allocation7 + $0x88] sm:$0xff]
        %v913 = vld [vmem:[#allocation7 + $0x90] sm:$0xff]
        %v914 = vld [vmem:[#allocation7 + $0x98] sm:$0xff]
        %v915 = vld [vmem:[#allocation7 + $0xa0] sm:$0xff]
        %v916 = vld [vmem:[#allocation7 + $0xa8] sm:$0xff]
        %v917 = vld [vmem:[#allocation7 + $0xb0] sm:$0xff]
        %v918 = vld [vmem:[#allocation7 + $0xb8] sm:$0xff]
        %v919 = vld [vmem:[#allocation7 + $0xc0] sm:$0xff]
        %v920 = vld [vmem:[#allocation7 + $0xc8] sm:$0xff]
        %v921 = vld [vmem:[#allocation7 + $0xd0] sm:$0xff]
        %v922 = vld [vmem:[#allocation7 + $0xd8] sm:$0xff]
        %v923 = vld [vmem:[#allocation7 + $0xe0] sm:$0xff]
        %v924 = vld [vmem:[#allocation7 + $0xe8] sm:$0xff]
        %v925 = vld [vmem:[#allocation7 + $0xf0] sm:$0xff]
        %v926 = vld [vmem:[#allocation7 + $0xf8] sm:$0xff]
        %v927 = vld [vmem:[#allocation7 + $0x100] sm:$0xff]
        %v928 = vld [vmem:[#allocation7 + $0x108] sm:$0xff]
        %v929 = vld [vmem:[#allocation7 + $0x110] sm:$0xff]
        %v930 = vld [vmem:[#allocation7 + $0x118] sm:$0xff]
        %v931 = vld [vmem:[#allocation7 + $0x120] sm:$0xff]
        %v932 = vld [vmem:[#allocation7 + $0x128] sm:$0xff]
        %v933 = vld [vmem:[#allocation7 + $0x130] sm:$0xff]
        %v934 = vld [vmem:[#allocation7 + $0x138] sm:$0xff]
        %v935 = vld [vmem:[#allocation7 + $0x140] sm:$0xff]
        %v936 = vld [vmem:[#allocation7 + $0x148] sm:$0xff]
        %v937 = vld [vmem:[#allocation7 + $0x150] sm:$0xff]
        %v938 = vld [vmem:[#allocation7 + $0x158] sm:$0xff]
        %v939 = vld [vmem:[#allocation7 + $0x160] sm:$0xff]
        %v940 = vld [vmem:[#allocation7 + $0x168] sm:$0xff]
        %v941 = vld [vmem:[#allocation7 + $0x170] sm:$0xff]
        %v942 = vld [vmem:[#allocation7 + $0x178] sm:$0xff]
        %v943 = vld [vmem:[#allocation7 + $0x180] sm:$0xff]
        %v944 = vld [vmem:[#allocation7 + $0x188] sm:$0xff]
        %v945 = vld [vmem:[#allocation7 + $0x190] sm:$0xff]
        %v946 = vld [vmem:[#allocation7 + $0x198] sm:$0xff]
        %v947 = vld [vmem:[#allocation7 + $0x1a0] sm:$0xff]
        %v948 = vld [vmem:[#allocation7 + $0x1a8] sm:$0xff]
        %v949 = vld [vmem:[#allocation7 + $0x1b0] sm:$0xff]
        %v950 = vld [vmem:[#allocation7 + $0x1b8] sm:$0xff]
        %v951 = vld [vmem:[#allocation7 + $0x1c0] sm:$0xff]
        %v952 = vld [vmem:[#allocation7 + $0x1c8] sm:$0xff]
        %v953 = vld [vmem:[#allocation7 + $0x1d0] sm:$0xff]
        %v954 = vld [vmem:[#allocation7 + $0x1d8] sm:$0xff]
        %v955 = vld [vmem:[#allocation7 + $0x1e0] sm:$0xff]
        %v956 = vld [vmem:[#allocation7 + $0x1e8] sm:$0xff]
        %v957 = vld [vmem:[#allocation7 + $0x1f0] sm:$0xff]
        %v958 = vld [vmem:[#allocation7 + $0x1f8] sm:$0xff]
        %v1023 = vunpack.c.l.b16 %v895
        %v1024 = vunpack.c.h.b16 %v895
        %v1025 = vunpack.c.l.b16 %v896
        %v1026 = vunpack.c.h.b16 %v896
        %v1027 = vunpack.c.l.b16 %v897
        %v1028 = vunpack.c.h.b16 %v897
        %v1029 = vunpack.c.l.b16 %v898
        %v1030 = vunpack.c.h.b16 %v898
        %v1031 = vunpack.c.l.b16 %v899
        %v1032 = vunpack.c.h.b16 %v899
        %v1033 = vunpack.c.l.b16 %v900
        %v1034 = vunpack.c.h.b16 %v900
        %v1035 = vunpack.c.l.b16 %v901
        %v1036 = vunpack.c.h.b16 %v901
        %v1037 = vunpack.c.l.b16 %v902
        %v1038 = vunpack.c.h.b16 %v902
        %v1039 = vunpack.c.l.b16 %v903
        %v1040 = vunpack.c.h.b16 %v903
        %v1041 = vunpack.c.l.b16 %v904
        %v1042 = vunpack.c.h.b16 %v904
        %v1043 = vunpack.c.l.b16 %v905
        %v1044 = vunpack.c.h.b16 %v905
        %v1045 = vunpack.c.l.b16 %v906
        %v1046 = vunpack.c.h.b16 %v906
        %v1047 = vunpack.c.l.b16 %v907
        %v1048 = vunpack.c.h.b16 %v907
        %v1049 = vunpack.c.l.b16 %v908
        %v1050 = vunpack.c.h.b16 %v908
        %v1051 = vunpack.c.l.b16 %v909
        %v1052 = vunpack.c.h.b16 %v909
        %v1053 = vunpack.c.l.b16 %v910
        %v1054 = vunpack.c.h.b16 %v910
        %v1055 = vunpack.c.l.b16 %v911
        %v1056 = vunpack.c.h.b16 %v911
        %v1057 = vunpack.c.l.b16 %v912
        %v1058 = vunpack.c.h.b16 %v912
        %v1059 = vunpack.c.l.b16 %v913
        %v1060 = vunpack.c.h.b16 %v913
        %v1061 = vunpack.c.l.b16 %v914
        %v1062 = vunpack.c.h.b16 %v914
        %v1063 = vunpack.c.l.b16 %v915
        %v1064 = vunpack.c.h.b16 %v915
        %v1065 = vunpack.c.l.b16 %v916
        %v1066 = vunpack.c.h.b16 %v916
        %v1067 = vunpack.c.l.b16 %v917
        %v1068 = vunpack.c.h.b16 %v917
        %v1069 = vunpack.c.l.b16 %v918
        %v1070 = vunpack.c.h.b16 %v918
        %v1071 = vunpack.c.l.b16 %v919
        %v1072 = vunpack.c.h.b16 %v919
        %v1073 = vunpack.c.l.b16 %v920
        %v1074 = vunpack.c.h.b16 %v920
        %v1075 = vunpack.c.l.b16 %v921
        %v1076 = vunpack.c.h.b16 %v921
        %v1077 = vunpack.c.l.b16 %v922
        %v1078 = vunpack.c.h.b16 %v922
        %v1079 = vunpack.c.l.b16 %v923
        %v1080 = vunpack.c.h.b16 %v923
        %v1081 = vunpack.c.l.b16 %v924
        %v1082 = vunpack.c.h.b16 %v924
        %v1083 = vunpack.c.l.b16 %v925
        %v1084 = vunpack.c.h.b16 %v925
        %v1085 = vunpack.c.l.b16 %v926
        %v1086 = vunpack.c.h.b16 %v926
        %v1087 = vunpack.c.l.b16 %v927
        %v1088 = vunpack.c.h.b16 %v927
        %v1089 = vunpack.c.l.b16 %v928
        %v1090 = vunpack.c.h.b16 %v928
        %v1091 = vunpack.c.l.b16 %v929
        %v1092 = vunpack.c.h.b16 %v929
        %v1093 = vunpack.c.l.b16 %v930
        %v1094 = vunpack.c.h.b16 %v930
        %v1095 = vunpack.c.l.b16 %v931
        %v1096 = vunpack.c.h.b16 %v931
        %v1097 = vunpack.c.l.b16 %v932
        %v1098 = vunpack.c.h.b16 %v932
        %v1099 = vunpack.c.l.b16 %v933
        %v1100 = vunpack.c.h.b16 %v933
        %v1101 = vunpack.c.l.b16 %v934
        %v1102 = vunpack.c.h.b16 %v934
        %v1103 = vunpack.c.l.b16 %v935
        %v1104 = vunpack.c.h.b16 %v935
        %v1105 = vunpack.c.l.b16 %v936
        %v1106 = vunpack.c.h.b16 %v936
        %v1107 = vunpack.c.l.b16 %v937
        %v1108 = vunpack.c.h.b16 %v937
        %v1109 = vunpack.c.l.b16 %v938
        %v1110 = vunpack.c.h.b16 %v938
        %v1111 = vunpack.c.l.b16 %v939
        %v1112 = vunpack.c.h.b16 %v939
        %v1113 = vunpack.c.l.b16 %v940
        %v1114 = vunpack.c.h.b16 %v940
        %v1115 = vunpack.c.l.b16 %v941
        %v1116 = vunpack.c.h.b16 %v941
        %v1117 = vunpack.c.l.b16 %v942
        %v1118 = vunpack.c.h.b16 %v942
        %v1119 = vunpack.c.l.b16 %v943
        %v1120 = vunpack.c.h.b16 %v943
        %v1121 = vunpack.c.l.b16 %v944
        %v1122 = vunpack.c.h.b16 %v944
        %v1123 = vunpack.c.l.b16 %v945
        %v1124 = vunpack.c.h.b16 %v945
        %v1125 = vunpack.c.l.b16 %v946
        %v1126 = vunpack.c.h.b16 %v946
        %v1127 = vunpack.c.l.b16 %v947
        %v1128 = vunpack.c.h.b16 %v947
        %v1129 = vunpack.c.l.b16 %v948
        %v1130 = vunpack.c.h.b16 %v948
        %v1131 = vunpack.c.l.b16 %v949
        %v1132 = vunpack.c.h.b16 %v949
        %v1133 = vunpack.c.l.b16 %v950
        %v1134 = vunpack.c.h.b16 %v950
        %v1135 = vunpack.c.l.b16 %v951
        %v1136 = vunpack.c.h.b16 %v951
        %v1137 = vunpack.c.l.b16 %v952
        %v1138 = vunpack.c.h.b16 %v952
        %v1139 = vunpack.c.l.b16 %v953
        %v1140 = vunpack.c.h.b16 %v953
        %v1141 = vunpack.c.l.b16 %v954
        %v1142 = vunpack.c.h.b16 %v954
        %v1143 = vunpack.c.l.b16 %v955
        %v1144 = vunpack.c.h.b16 %v955
        %v1145 = vunpack.c.l.b16 %v956
        %v1146 = vunpack.c.h.b16 %v956
        %v1147 = vunpack.c.l.b16 %v957
        %v1148 = vunpack.c.h.b16 %v957
        %v1149 = vunpack.c.l.b16 %v958
        %v1150 = vunpack.c.h.b16 %v958
        %v1151 = vpack.c.b16 %v1027, %v1023
        %v1152 = vpack.c.b16 %v1028, %v1024
        %v1153 = vpack.c.b16 %v1029, %v1025
        %v1154 = vpack.c.b16 %v1030, %v1026
        %v1155 = vpack.c.b16 %v1035, %v1031
        %v1156 = vpack.c.b16 %v1036, %v1032
        %v1157 = vpack.c.b16 %v1037, %v1033
        %v1158 = vpack.c.b16 %v1038, %v1034
        %v1159 = vpack.c.b16 %v1043, %v1039
        %v1160 = vpack.c.b16 %v1044, %v1040
        %v1161 = vpack.c.b16 %v1045, %v1041
        %v1162 = vpack.c.b16 %v1046, %v1042
        %v1163 = vpack.c.b16 %v1051, %v1047
        %v1164 = vpack.c.b16 %v1052, %v1048
        %v1165 = vpack.c.b16 %v1053, %v1049
        %v1166 = vpack.c.b16 %v1054, %v1050
        %v1167 = vpack.c.b16 %v1059, %v1055
        %v1168 = vpack.c.b16 %v1060, %v1056
        %v1169 = vpack.c.b16 %v1061, %v1057
        %v1170 = vpack.c.b16 %v1062, %v1058
        %v1171 = vpack.c.b16 %v1067, %v1063
        %v1172 = vpack.c.b16 %v1068, %v1064
        %v1173 = vpack.c.b16 %v1069, %v1065
        %v1174 = vpack.c.b16 %v1070, %v1066
        %v1175 = vpack.c.b16 %v1075, %v1071
        %v1176 = vpack.c.b16 %v1076, %v1072
        %v1177 = vpack.c.b16 %v1077, %v1073
        %v1178 = vpack.c.b16 %v1078, %v1074
        %v1179 = vpack.c.b16 %v1083, %v1079
        %v1180 = vpack.c.b16 %v1084, %v1080
        %v1181 = vpack.c.b16 %v1085, %v1081
        %v1182 = vpack.c.b16 %v1086, %v1082
        %v1183 = vpack.c.b16 %v1091, %v1087
        %v1184 = vpack.c.b16 %v1092, %v1088
        %v1185 = vpack.c.b16 %v1093, %v1089
        %v1186 = vpack.c.b16 %v1094, %v1090
        %v1187 = vpack.c.b16 %v1099, %v1095
        %v1188 = vpack.c.b16 %v1100, %v1096
        %v1189 = vpack.c.b16 %v1101, %v1097
        %v1190 = vpack.c.b16 %v1102, %v1098
        %v1191 = vpack.c.b16 %v1107, %v1103
        %v1192 = vpack.c.b16 %v1108, %v1104
        %v1193 = vpack.c.b16 %v1109, %v1105
        %v1194 = vpack.c.b16 %v1110, %v1106
        %v1195 = vpack.c.b16 %v1115, %v1111
        %v1196 = vpack.c.b16 %v1116, %v1112
        %v1197 = vpack.c.b16 %v1117, %v1113
        %v1198 = vpack.c.b16 %v1118, %v1114
        %v1199 = vpack.c.b16 %v1123, %v1119
        %v1200 = vpack.c.b16 %v1124, %v1120
        %v1201 = vpack.c.b16 %v1125, %v1121
        %v1202 = vpack.c.b16 %v1126, %v1122
        %v1203 = vpack.c.b16 %v1131, %v1127
        %v1204 = vpack.c.b16 %v1132, %v1128
        %v1205 = vpack.c.b16 %v1133, %v1129
        %v1206 = vpack.c.b16 %v1134, %v1130
        %v1207 = vpack.c.b16 %v1139, %v1135
        %v1208 = vpack.c.b16 %v1140, %v1136
        %v1209 = vpack.c.b16 %v1141, %v1137
        %v1210 = vpack.c.b16 %v1142, %v1138
        %v1211 = vpack.c.b16 %v1147, %v1143
        %v1212 = vpack.c.b16 %v1148, %v1144
        %v1213 = vpack.c.b16 %v1149, %v1145
        %v1214 = vpack.c.b16 %v1150, %v1146
        %1279 = vmatpush.bf16.msra.mxu0 %v1179
        %1280 = vmatpush.bf16.msra.mxu0 %v1175
        %1281 = vmatpush.bf16.msra.mxu0 %v1171
        %1282 = vmatpush.bf16.msra.mxu0 %v1167
        %1283 = vmatpush.bf16.msra.mxu0 %v1163
        %1284 = vmatpush.bf16.msra.mxu0 %v1159
        %1285 = vmatpush.bf16.msra.mxu0 %v1155
        %1286 = vmatpush.bf16.msra.mxu0 %v1151
        %1287 = vmatmul.bf16.gmra.mxu0 %v829
        %v1288 = vpop.f32.mrf.mxu0
        %v1289 = vadd.f32 0.0, %v1288
        %v1290 = vpop.f32.mrf.mxu0
        %1291 = vdwg.mxu0
        %1292 = vmatpush.bf16.msra.mxu0 %v1211
        %1293 = vmatpush.bf16.msra.mxu0 %v1207
        %1294 = vmatpush.bf16.msra.mxu0 %v1203
        %1295 = vmatpush.bf16.msra.mxu0 %v1199
        %1296 = vmatpush.bf16.msra.mxu0 %v1195
        %1297 = vmatpush.bf16.msra.mxu0 %v1191
        %1298 = vmatpush.bf16.msra.mxu0 %v1187
        %1299 = vmatpush.bf16.msra.mxu0 %v1183
        %1300 = vmatmul.bf16.gmra.mxu0 %v830
        %v1301 = vpop.f32.mrf.mxu0
        %v1302 = vadd.f32 %v1289, %v1301
        %v1303 = vpop.f32.mrf.mxu0
        %1304 = vdwg.mxu0
        %1305 = vmatpush.bf16.msra.mxu0 %v1180
        %1306 = vmatpush.bf16.msra.mxu0 %v1176
        %1307 = vmatpush.bf16.msra.mxu0 %v1172
        %1308 = vmatpush.bf16.msra.mxu0 %v1168
        %1309 = vmatpush.bf16.msra.mxu0 %v1164
        %1310 = vmatpush.bf16.msra.mxu0 %v1160
        %1311 = vmatpush.bf16.msra.mxu0 %v1156
        %1312 = vmatpush.bf16.msra.mxu0 %v1152
        %1313 = vmatmul.bf16.gmra.mxu0 %v829
        %v1314 = vpop.f32.mrf.mxu0
        %v1315 = vadd.f32 0.0, %v1314
        %v1316 = vpop.f32.mrf.mxu0
        %1317 = vdwg.mxu0
        %1318 = vmatpush.bf16.msra.mxu0 %v1212
        %1319 = vmatpush.bf16.msra.mxu0 %v1208
        %1320 = vmatpush.bf16.msra.mxu0 %v1204
        %1321 = vmatpush.bf16.msra.mxu0 %v1200
        %1322 = vmatpush.bf16.msra.mxu0 %v1196
        %1323 = vmatpush.bf16.msra.mxu0 %v1192
        %1324 = vmatpush.bf16.msra.mxu0 %v1188
        %1325 = vmatpush.bf16.msra.mxu0 %v1184
        %1326 = vmatmul.bf16.gmra.mxu0 %v830
        %v1327 = vpop.f32.mrf.mxu0
        %v1328 = vadd.f32 %v1315, %v1327
        %v1329 = vpop.f32.mrf.mxu0
        %1330 = vdwg.mxu0
        %1331 = vmatpush.bf16.msra.mxu0 %v1181
        %1332 = vmatpush.bf16.msra.mxu0 %v1177
        %1333 = vmatpush.bf16.msra.mxu0 %v1173
        %1334 = vmatpush.bf16.msra.mxu0 %v1169
        %1335 = vmatpush.bf16.msra.mxu0 %v1165
        %1336 = vmatpush.bf16.msra.mxu0 %v1161
        %1337 = vmatpush.bf16.msra.mxu0 %v1157
        %1338 = vmatpush.bf16.msra.mxu0 %v1153
        %1339 = vmatmul.bf16.gmra.mxu0 %v829
        %v1340 = vpop.f32.mrf.mxu0
        %v1341 = vadd.f32 0.0, %v1340
        %v1342 = vpop.f32.mrf.mxu0
        %1343 = vdwg.mxu0
        %1344 = vmatpush.bf16.msra.mxu0 %v1213
        %1345 = vmatpush.bf16.msra.mxu0 %v1209
        %1346 = vmatpush.bf16.msra.mxu0 %v1205
        %1347 = vmatpush.bf16.msra.mxu0 %v1201
        %1348 = vmatpush.bf16.msra.mxu0 %v1197
        %1349 = vmatpush.bf16.msra.mxu0 %v1193
        %1350 = vmatpush.bf16.msra.mxu0 %v1189
        %1351 = vmatpush.bf16.msra.mxu0 %v1185
        %1352 = vmatmul.bf16.gmra.mxu0 %v830
        %v1353 = vpop.f32.mrf.mxu0
        %v1354 = vadd.f32 %v1341, %v1353
        %v1355 = vpop.f32.mrf.mxu0
        %1356 = vdwg.mxu0
        %1357 = vmatpush.bf16.msra.mxu0 %v1182
        %1358 = vmatpush.bf16.msra.mxu0 %v1178
        %1359 = vmatpush.bf16.msra.mxu0 %v1174
        %1360 = vmatpush.bf16.msra.mxu0 %v1170
        %1361 = vmatpush.bf16.msra.mxu0 %v1166
        %1362 = vmatpush.bf16.msra.mxu0 %v1162
        %1363 = vmatpush.bf16.msra.mxu0 %v1158
        %1364 = vmatpush.bf16.msra.mxu0 %v1154
        %1365 = vmatmul.bf16.gmra.mxu0 %v829
        %v1366 = vpop.f32.mrf.mxu0
        %v1367 = vadd.f32 0.0, %v1366
        %v1368 = vpop.f32.mrf.mxu0
        %1369 = vdwg.mxu0
        %1370 = vmatpush.bf16.msra.mxu0 %v1214
        %1371 = vmatpush.bf16.msra.mxu0 %v1210
        %1372 = vmatpush.bf16.msra.mxu0 %v1206
        %1373 = vmatpush.bf16.msra.mxu0 %v1202
        %1374 = vmatpush.bf16.msra.mxu0 %v1198
        %1375 = vmatpush.bf16.msra.mxu0 %v1194
        %1376 = vmatpush.bf16.msra.mxu0 %v1190
        %1377 = vmatpush.bf16.msra.mxu0 %v1186
        %1378 = vmatmul.bf16.gmra.mxu0 %v830
        %v1379 = vpop.f32.mrf.mxu0
        %v1380 = vadd.f32 %v1367, %v1379
        %v1381 = vpop.f32.mrf.mxu0
        %1382 = vdwg.mxu0
        %v1447 = vunpack.c.l.b16 %v831
        %v1448 = vunpack.c.h.b16 %v831
        %v1449 = vunpack.c.l.b16 %v832
        %v1450 = vunpack.c.h.b16 %v832
        %v1451 = vunpack.c.l.b16 %v833
        %v1452 = vunpack.c.h.b16 %v833
        %v1453 = vunpack.c.l.b16 %v834
        %v1454 = vunpack.c.h.b16 %v834
        %v1455 = vunpack.c.l.b16 %v835
        %v1456 = vunpack.c.h.b16 %v835
        %v1457 = vunpack.c.l.b16 %v836
        %v1458 = vunpack.c.h.b16 %v836
        %v1459 = vunpack.c.l.b16 %v837
        %v1460 = vunpack.c.h.b16 %v837
        %v1461 = vunpack.c.l.b16 %v838
        %v1462 = vunpack.c.h.b16 %v838
        %v1463 = vunpack.c.l.b16 %v839
        %v1464 = vunpack.c.h.b16 %v839
        %v1465 = vunpack.c.l.b16 %v840
        %v1466 = vunpack.c.h.b16 %v840
        %v1467 = vunpack.c.l.b16 %v841
        %v1468 = vunpack.c.h.b16 %v841
        %v1469 = vunpack.c.l.b16 %v842
        %v1470 = vunpack.c.h.b16 %v842
        %v1471 = vunpack.c.l.b16 %v843
        %v1472 = vunpack.c.h.b16 %v843
        %v1473 = vunpack.c.l.b16 %v844
        %v1474 = vunpack.c.h.b16 %v844
        %v1475 = vunpack.c.l.b16 %v845
        %v1476 = vunpack.c.h.b16 %v845
        %v1477 = vunpack.c.l.b16 %v846
        %v1478 = vunpack.c.h.b16 %v846
        %v1479 = vunpack.c.l.b16 %v847
        %v1480 = vunpack.c.h.b16 %v847
        %v1481 = vunpack.c.l.b16 %v848
        %v1482 = vunpack.c.h.b16 %v848
        %v1483 = vunpack.c.l.b16 %v849
        %v1484 = vunpack.c.h.b16 %v849
        %v1485 = vunpack.c.l.b16 %v850
        %v1486 = vunpack.c.h.b16 %v850
        %v1487 = vunpack.c.l.b16 %v851
        %v1488 = vunpack.c.h.b16 %v851
        %v1489 = vunpack.c.l.b16 %v852
        %v1490 = vunpack.c.h.b16 %v852
        %v1491 = vunpack.c.l.b16 %v853
        %v1492 = vunpack.c.h.b16 %v853
        %v1493 = vunpack.c.l.b16 %v854
        %v1494 = vunpack.c.h.b16 %v854
        %v1495 = vunpack.c.l.b16 %v855
        %v1496 = vunpack.c.h.b16 %v855
        %v1497 = vunpack.c.l.b16 %v856
        %v1498 = vunpack.c.h.b16 %v856
        %v1499 = vunpack.c.l.b16 %v857
        %v1500 = vunpack.c.h.b16 %v857
        %v1501 = vunpack.c.l.b16 %v858
        %v1502 = vunpack.c.h.b16 %v858
        %v1503 = vunpack.c.l.b16 %v859
        %v1504 = vunpack.c.h.b16 %v859
        %v1505 = vunpack.c.l.b16 %v860
        %v1506 = vunpack.c.h.b16 %v860
        %v1507 = vunpack.c.l.b16 %v861
        %v1508 = vunpack.c.h.b16 %v861
        %v1509 = vunpack.c.l.b16 %v862
        %v1510 = vunpack.c.h.b16 %v862
        %v1511 = vunpack.c.l.b16 %v863
        %v1512 = vunpack.c.h.b16 %v863
        %v1513 = vunpack.c.l.b16 %v864
        %v1514 = vunpack.c.h.b16 %v864
        %v1515 = vunpack.c.l.b16 %v865
        %v1516 = vunpack.c.h.b16 %v865
        %v1517 = vunpack.c.l.b16 %v866
        %v1518 = vunpack.c.h.b16 %v866
        %v1519 = vunpack.c.l.b16 %v867
        %v1520 = vunpack.c.h.b16 %v867
        %v1521 = vunpack.c.l.b16 %v868
        %v1522 = vunpack.c.h.b16 %v868
        %v1523 = vunpack.c.l.b16 %v869
        %v1524 = vunpack.c.h.b16 %v869
        %v1525 = vunpack.c.l.b16 %v870
        %v1526 = vunpack.c.h.b16 %v870
        %v1527 = vunpack.c.l.b16 %v871
        %v1528 = vunpack.c.h.b16 %v871
        %v1529 = vunpack.c.l.b16 %v872
        %v1530 = vunpack.c.h.b16 %v872
        %v1531 = vunpack.c.l.b16 %v873
        %v1532 = vunpack.c.h.b16 %v873
        %v1533 = vunpack.c.l.b16 %v874
        %v1534 = vunpack.c.h.b16 %v874
        %v1535 = vunpack.c.l.b16 %v875
        %v1536 = vunpack.c.h.b16 %v875
        %v1537 = vunpack.c.l.b16 %v876
        %v1538 = vunpack.c.h.b16 %v876
        %v1539 = vunpack.c.l.b16 %v877
        %v1540 = vunpack.c.h.b16 %v877
        %v1541 = vunpack.c.l.b16 %v878
        %v1542 = vunpack.c.h.b16 %v878
        %v1543 = vunpack.c.l.b16 %v879
        %v1544 = vunpack.c.h.b16 %v879
        %v1545 = vunpack.c.l.b16 %v880
        %v1546 = vunpack.c.h.b16 %v880
        %v1547 = vunpack.c.l.b16 %v881
        %v1548 = vunpack.c.h.b16 %v881
        %v1549 = vunpack.c.l.b16 %v882
        %v1550 = vunpack.c.h.b16 %v882
        %v1551 = vunpack.c.l.b16 %v883
        %v1552 = vunpack.c.h.b16 %v883
        %v1553 = vunpack.c.l.b16 %v884
        %v1554 = vunpack.c.h.b16 %v884
        %v1555 = vunpack.c.l.b16 %v885
        %v1556 = vunpack.c.h.b16 %v885
        %v1557 = vunpack.c.l.b16 %v886
        %v1558 = vunpack.c.h.b16 %v886
        %v1559 = vunpack.c.l.b16 %v887
        %v1560 = vunpack.c.h.b16 %v887
        %v1561 = vunpack.c.l.b16 %v888
        %v1562 = vunpack.c.h.b16 %v888
        %v1563 = vunpack.c.l.b16 %v889
        %v1564 = vunpack.c.h.b16 %v889
        %v1565 = vunpack.c.l.b16 %v890
        %v1566 = vunpack.c.h.b16 %v890
        %v1567 = vunpack.c.l.b16 %v891
        %v1568 = vunpack.c.h.b16 %v891
        %v1569 = vunpack.c.l.b16 %v892
        %v1570 = vunpack.c.h.b16 %v892
        %v1571 = vunpack.c.l.b16 %v893
        %v1572 = vunpack.c.h.b16 %v893
        %v1573 = vunpack.c.l.b16 %v894
        %v1574 = vunpack.c.h.b16 %v894
        %v1575 = vpack.c.b16 %v1451, %v1447
        %v1576 = vpack.c.b16 %v1452, %v1448
        %v1577 = vpack.c.b16 %v1453, %v1449
        %v1578 = vpack.c.b16 %v1454, %v1450
        %v1579 = vpack.c.b16 %v1459, %v1455
        %v1580 = vpack.c.b16 %v1460, %v1456
        %v1581 = vpack.c.b16 %v1461, %v1457
        %v1582 = vpack.c.b16 %v1462, %v1458
        %v1583 = vpack.c.b16 %v1467, %v1463
        %v1584 = vpack.c.b16 %v1468, %v1464
        %v1585 = vpack.c.b16 %v1469, %v1465
        %v1586 = vpack.c.b16 %v1470, %v1466
        %v1587 = vpack.c.b16 %v1475, %v1471
        %v1588 = vpack.c.b16 %v1476, %v1472
        %v1589 = vpack.c.b16 %v1477, %v1473
        %v1590 = vpack.c.b16 %v1478, %v1474
        %v1591 = vpack.c.b16 %v1483, %v1479
        %v1592 = vpack.c.b16 %v1484, %v1480
        %v1593 = vpack.c.b16 %v1485, %v1481
        %v1594 = vpack.c.b16 %v1486, %v1482
        %v1595 = vpack.c.b16 %v1491, %v1487
        %v1596 = vpack.c.b16 %v1492, %v1488
        %v1597 = vpack.c.b16 %v1493, %v1489
        %v1598 = vpack.c.b16 %v1494, %v1490
        %v1599 = vpack.c.b16 %v1499, %v1495
        %v1600 = vpack.c.b16 %v1500, %v1496
        %v1601 = vpack.c.b16 %v1501, %v1497
        %v1602 = vpack.c.b16 %v1502, %v1498
        %v1603 = vpack.c.b16 %v1507, %v1503
        %v1604 = vpack.c.b16 %v1508, %v1504
        %v1605 = vpack.c.b16 %v1509, %v1505
        %v1606 = vpack.c.b16 %v1510, %v1506
        %v1607 = vpack.c.b16 %v1515, %v1511
        %v1608 = vpack.c.b16 %v1516, %v1512
        %v1609 = vpack.c.b16 %v1517, %v1513
        %v1610 = vpack.c.b16 %v1518, %v1514
        %v1611 = vpack.c.b16 %v1523, %v1519
        %v1612 = vpack.c.b16 %v1524, %v1520
        %v1613 = vpack.c.b16 %v1525, %v1521
        %v1614 = vpack.c.b16 %v1526, %v1522
        %v1615 = vpack.c.b16 %v1531, %v1527
        %v1616 = vpack.c.b16 %v1532, %v1528
        %v1617 = vpack.c.b16 %v1533, %v1529
        %v1618 = vpack.c.b16 %v1534, %v1530
        %v1619 = vpack.c.b16 %v1539, %v1535
        %v1620 = vpack.c.b16 %v1540, %v1536
        %v1621 = vpack.c.b16 %v1541, %v1537
        %v1622 = vpack.c.b16 %v1542, %v1538
        %v1623 = vpack.c.b16 %v1547, %v1543
        %v1624 = vpack.c.b16 %v1548, %v1544
        %v1625 = vpack.c.b16 %v1549, %v1545
        %v1626 = vpack.c.b16 %v1550, %v1546
        %v1627 = vpack.c.b16 %v1555, %v1551
        %v1628 = vpack.c.b16 %v1556, %v1552
        %v1629 = vpack.c.b16 %v1557, %v1553
        %v1630 = vpack.c.b16 %v1558, %v1554
        %v1631 = vpack.c.b16 %v1563, %v1559
        %v1632 = vpack.c.b16 %v1564, %v1560
        %v1633 = vpack.c.b16 %v1565, %v1561
        %v1634 = vpack.c.b16 %v1566, %v1562
        %v1635 = vpack.c.b16 %v1571, %v1567
        %v1636 = vpack.c.b16 %v1572, %v1568
        %v1637 = vpack.c.b16 %v1573, %v1569
        %v1638 = vpack.c.b16 %v1574, %v1570
        %1703 = vmatpush.bf16.msra.mxu0 %v1603
        %1704 = vmatpush.bf16.msra.mxu0 %v1599
        %1705 = vmatpush.bf16.msra.mxu0 %v1595
        %1706 = vmatpush.bf16.msra.mxu0 %v1591
        %1707 = vmatpush.bf16.msra.mxu0 %v1587
        %1708 = vmatpush.bf16.msra.mxu0 %v1583
        %1709 = vmatpush.bf16.msra.mxu0 %v1579
        %1710 = vmatpush.bf16.msra.mxu0 %v1575
        %1711 = vmatmul.bf16.gmra.mxu0 %v827
        %v1712 = vpop.f32.mrf.mxu0
        %v1713 = vadd.f32 %v1302, %v1712
        %v1714 = vpop.f32.mrf.mxu0
        %1715 = vdwg.mxu0
        %1716 = vmatpush.bf16.msra.mxu0 %v1635
        %1717 = vmatpush.bf16.msra.mxu0 %v1631
        %1718 = vmatpush.bf16.msra.mxu0 %v1627
        %1719 = vmatpush.bf16.msra.mxu0 %v1623
        %1720 = vmatpush.bf16.msra.mxu0 %v1619
        %1721 = vmatpush.bf16.msra.mxu0 %v1615
        %1722 = vmatpush.bf16.msra.mxu0 %v1611
        %1723 = vmatpush.bf16.msra.mxu0 %v1607
        %1724 = vmatmul.bf16.gmra.mxu0 %v828
        %v1725 = vpop.f32.mrf.mxu0
        %v1726 = vadd.f32 %v1713, %v1725
        %v1727 = vpop.f32.mrf.mxu0
        %1728 = vdwg.mxu0
        %1729 = vmatpush.bf16.msra.mxu0 %v1604
        %1730 = vmatpush.bf16.msra.mxu0 %v1600
        %1731 = vmatpush.bf16.msra.mxu0 %v1596
        %1732 = vmatpush.bf16.msra.mxu0 %v1592
        %1733 = vmatpush.bf16.msra.mxu0 %v1588
        %1734 = vmatpush.bf16.msra.mxu0 %v1584
        %1735 = vmatpush.bf16.msra.mxu0 %v1580
        %1736 = vmatpush.bf16.msra.mxu0 %v1576
        %1737 = vmatmul.bf16.gmra.mxu0 %v827
        %v1738 = vpop.f32.mrf.mxu0
        %v1739 = vadd.f32 %v1328, %v1738
        %v1740 = vpop.f32.mrf.mxu0
        %1741 = vdwg.mxu0
        %1742 = vmatpush.bf16.msra.mxu0 %v1636
        %1743 = vmatpush.bf16.msra.mxu0 %v1632
        %1744 = vmatpush.bf16.msra.mxu0 %v1628
        %1745 = vmatpush.bf16.msra.mxu0 %v1624
        %1746 = vmatpush.bf16.msra.mxu0 %v1620
        %1747 = vmatpush.bf16.msra.mxu0 %v1616
        %1748 = vmatpush.bf16.msra.mxu0 %v1612
        %1749 = vmatpush.bf16.msra.mxu0 %v1608
        %1750 = vmatmul.bf16.gmra.mxu0 %v828
        %v1751 = vpop.f32.mrf.mxu0
        %v1752 = vadd.f32 %v1739, %v1751
        %v1753 = vpop.f32.mrf.mxu0
        %1754 = vdwg.mxu0
        %1755 = vmatpush.bf16.msra.mxu0 %v1605
        %1756 = vmatpush.bf16.msra.mxu0 %v1601
        %1757 = vmatpush.bf16.msra.mxu0 %v1597
        %1758 = vmatpush.bf16.msra.mxu0 %v1593
        %1759 = vmatpush.bf16.msra.mxu0 %v1589
        %1760 = vmatpush.bf16.msra.mxu0 %v1585
        %1761 = vmatpush.bf16.msra.mxu0 %v1581
        %1762 = vmatpush.bf16.msra.mxu0 %v1577
        %1763 = vmatmul.bf16.gmra.mxu0 %v827
        %v1764 = vpop.f32.mrf.mxu0
        %v1765 = vadd.f32 %v1354, %v1764
        %v1766 = vpop.f32.mrf.mxu0
        %1767 = vdwg.mxu0
        %1768 = vmatpush.bf16.msra.mxu0 %v1637
        %1769 = vmatpush.bf16.msra.mxu0 %v1633
        %1770 = vmatpush.bf16.msra.mxu0 %v1629
        %1771 = vmatpush.bf16.msra.mxu0 %v1625
        %1772 = vmatpush.bf16.msra.mxu0 %v1621
        %1773 = vmatpush.bf16.msra.mxu0 %v1617
        %1774 = vmatpush.bf16.msra.mxu0 %v1613
        %1775 = vmatpush.bf16.msra.mxu0 %v1609
        %1776 = vmatmul.bf16.gmra.mxu0 %v828
        %v1777 = vpop.f32.mrf.mxu0
        %v1778 = vadd.f32 %v1765, %v1777
        %v1779 = vpop.f32.mrf.mxu0
        %1780 = vdwg.mxu0
        %1781 = vmatpush.bf16.msra.mxu0 %v1606
        %1782 = vmatpush.bf16.msra.mxu0 %v1602
        %1783 = vmatpush.bf16.msra.mxu0 %v1598
        %1784 = vmatpush.bf16.msra.mxu0 %v1594
        %1785 = vmatpush.bf16.msra.mxu0 %v1590
        %1786 = vmatpush.bf16.msra.mxu0 %v1586
        %1787 = vmatpush.bf16.msra.mxu0 %v1582
        %1788 = vmatpush.bf16.msra.mxu0 %v1578
        %1789 = vmatmul.bf16.gmra.mxu0 %v827
        %v1790 = vpop.f32.mrf.mxu0
        %v1791 = vadd.f32 %v1380, %v1790
        %v1792 = vpop.f32.mrf.mxu0
        %1793 = vdwg.mxu0
        %1794 = vmatpush.bf16.msra.mxu0 %v1638
        %1795 = vmatpush.bf16.msra.mxu0 %v1634
        %1796 = vmatpush.bf16.msra.mxu0 %v1630
        %1797 = vmatpush.bf16.msra.mxu0 %v1626
        %1798 = vmatpush.bf16.msra.mxu0 %v1622
        %1799 = vmatpush.bf16.msra.mxu0 %v1618
        %1800 = vmatpush.bf16.msra.mxu0 %v1614
        %1801 = vmatpush.bf16.msra.mxu0 %v1610
        %1802 = vmatmul.bf16.gmra.mxu0 %v828
        %v1803 = vpop.f32.mrf.mxu0
        %v1804 = vadd.f32 %v1791, %v1803
        %v1805 = vpop.f32.mrf.mxu0
        %1806 = vdwg.mxu0
        %v1807 = vxor.u32 %v1726, 2147483648
        %v1808 = vxor.u32 %v1752, 2147483648
        %v1809 = vxor.u32 %v1778, 2147483648
        %v1810 = vxor.u32 %v1804, 2147483648
        %v1811 = vmul.f32 %v1807, 1.442695
        %v1812 = vpow.pop %v1811
        %v1813 = vmul.f32 %v1808, 1.442695
        %v1814 = vpow.pop %v1813
        %v1815 = vmul.f32 %v1809, 1.442695
        %v1816 = vpow.pop %v1815
        %v1817 = vmul.f32 %v1810, 1.442695
        %v1818 = vpow.pop %v1817
        %v1819 = vadd.f32 %v1812, 1.0
        %v1820 = vadd.f32 %v1814, 1.0
        %v1821 = vadd.f32 %v1816, 1.0
        %v1822 = vadd.f32 %v1818, 1.0
        %v1823 = vrcp.pop %v1819
        %v1824 = vmul.f32 %v1819, %v1823
        %v1825 = vsub.f32 1.0, %v1824
        %v1826 = vmul.f32 %v1823, %v1825
        %v1827 = vadd.f32 %v1823, %v1826
        %vm1828 = vweird.f32 %v1819
        %vm1829 = vweird.f32 %v1823
        %vm1830 = vmor %vm1828, %vm1829
        %v1831 = vsel %vm1830, %v1823, %v1827
        %v1832 = vand.u32 2147483647, %v1819
        %vm1833 = vcmp.eq.f32.partialorder %v1832, 8.507059e+37
        %v1834 = vand.u32 %v1819, 2147483648
        %v1835 = vor.u32 1.1754944e-38, %v1834
        %v1836 = vsel %vm1833, %v1835, %v1831
        %v1837 = vmul.f32 1.0, %v1836
        %v1838 = vrcp.pop %v1820
        %v1839 = vmul.f32 %v1820, %v1838
        %v1840 = vsub.f32 1.0, %v1839
        %v1841 = vmul.f32 %v1838, %v1840
        %v1842 = vadd.f32 %v1838, %v1841
        %vm1843 = vweird.f32 %v1820
        %vm1844 = vweird.f32 %v1838
        %vm1845 = vmor %vm1843, %vm1844
        %v1846 = vsel %vm1845, %v1838, %v1842
        %v1847 = vand.u32 2147483647, %v1820
        %vm1848 = vcmp.eq.f32.partialorder %v1847, 8.507059e+37
        %v1849 = vand.u32 %v1820, 2147483648
        %v1850 = vor.u32 1.1754944e-38, %v1849
        %v1851 = vsel %vm1848, %v1850, %v1846
        %v1852 = vmul.f32 1.0, %v1851
        %v1853 = vrcp.pop %v1821
        %v1854 = vmul.f32 %v1821, %v1853
        %v1855 = vsub.f32 1.0, %v1854
        %v1856 = vmul.f32 %v1853, %v1855
        %v1857 = vadd.f32 %v1853, %v1856
        %vm1858 = vweird.f32 %v1821
        %vm1859 = vweird.f32 %v1853
        %vm1860 = vmor %vm1858, %vm1859
        %v1861 = vsel %vm1860, %v1853, %v1857
        %v1862 = vand.u32 2147483647, %v1821
        %vm1863 = vcmp.eq.f32.partialorder %v1862, 8.507059e+37
        %v1864 = vand.u32 %v1821, 2147483648
        %v1865 = vor.u32 1.1754944e-38, %v1864
        %v1866 = vsel %vm1863, %v1865, %v1861
        %v1867 = vmul.f32 1.0, %v1866
        %v1868 = vrcp.pop %v1822
        %v1869 = vmul.f32 %v1822, %v1868
        %v1870 = vsub.f32 1.0, %v1869
        %v1871 = vmul.f32 %v1868, %v1870
        %v1872 = vadd.f32 %v1868, %v1871
        %vm1873 = vweird.f32 %v1822
        %vm1874 = vweird.f32 %v1868
        %vm1875 = vmor %vm1873, %vm1874
        %v1876 = vsel %vm1875, %v1868, %v1872
        %v1877 = vand.u32 2147483647, %v1822
        %vm1878 = vcmp.eq.f32.partialorder %v1877, 8.507059e+37
        %v1879 = vand.u32 %v1822, 2147483648
        %v1880 = vor.u32 1.1754944e-38, %v1879
        %v1881 = vsel %vm1878, %v1880, %v1876
        %v1882 = vmul.f32 1.0, %v1881
        %v1883 = vmul.f32 %v1837, %v807
        %v1884 = vmul.f32 %v1852, %v808
        %v1885 = vpack.c.bf16 %v1883, %v1883
        %v1886 = vpack.c.bf16 %v1884, %v1884
        %v1887 = vmul.f32 %v1867, %v817
        %v1888 = vmul.f32 %v1882, %v826
        %v1889 = vpack.c.bf16 %v1887, %v1887
        %v1890 = vpack.c.bf16 %v1888, %v1888
        %v1891 = vld [vmem:[#allocation8] sm:$0xff]
        %v1892 = vld [vmem:[#allocation8 + $0x8] sm:$0xff]
        %v1893 = vld [vmem:[#allocation8 + $0x10] sm:$0xff]
        %v1894 = vld [vmem:[#allocation8 + $0x18] sm:$0xff]
        %v1895 = vld [vmem:[#allocation8 + $0x20] sm:$0xff]
        %v1896 = vld [vmem:[#allocation8 + $0x28] sm:$0xff]
        %v1897 = vld [vmem:[#allocation8 + $0x30] sm:$0xff]
        %v1898 = vld [vmem:[#allocation8 + $0x38] sm:$0xff]
        %v1899 = vld [vmem:[#allocation8 + $0x40] sm:$0xff]
        %v1900 = vld [vmem:[#allocation8 + $0x48] sm:$0xff]
        %v1901 = vld [vmem:[#allocation8 + $0x50] sm:$0xff]
        %v1902 = vld [vmem:[#allocation8 + $0x58] sm:$0xff]
        %v1903 = vld [vmem:[#allocation8 + $0x60] sm:$0xff]
        %v1904 = vld [vmem:[#allocation8 + $0x68] sm:$0xff]
        %v1905 = vld [vmem:[#allocation8 + $0x70] sm:$0xff]
        %v1906 = vld [vmem:[#allocation8 + $0x78] sm:$0xff]
        %v1907 = vld [vmem:[#allocation8 + $0x80] sm:$0xff]
        %v1908 = vld [vmem:[#allocation8 + $0x88] sm:$0xff]
        %v1909 = vld [vmem:[#allocation8 + $0x90] sm:$0xff]
        %v1910 = vld [vmem:[#allocation8 + $0x98] sm:$0xff]
        %v1911 = vld [vmem:[#allocation8 + $0xa0] sm:$0xff]
        %v1912 = vld [vmem:[#allocation8 + $0xa8] sm:$0xff]
        %v1913 = vld [vmem:[#allocation8 + $0xb0] sm:$0xff]
        %v1914 = vld [vmem:[#allocation8 + $0xb8] sm:$0xff]
        %v1915 = vld [vmem:[#allocation8 + $0xc0] sm:$0xff]
        %v1916 = vld [vmem:[#allocation8 + $0xc8] sm:$0xff]
        %v1917 = vld [vmem:[#allocation8 + $0xd0] sm:$0xff]
        %v1918 = vld [vmem:[#allocation8 + $0xd8] sm:$0xff]
        %v1919 = vld [vmem:[#allocation8 + $0xe0] sm:$0xff]
        %v1920 = vld [vmem:[#allocation8 + $0xe8] sm:$0xff]
        %v1921 = vld [vmem:[#allocation8 + $0xf0] sm:$0xff]
        %v1922 = vld [vmem:[#allocation8 + $0xf8] sm:$0xff]
        %v1923 = vld [vmem:[#allocation10] sm:$0xff]
        %v1924 = vld [vmem:[#allocation10 + $0x8] sm:$0xff]
        %v1925 = vld [vmem:[#allocation10 + $0x10] sm:$0xff]
        %v1926 = vld [vmem:[#allocation10 + $0x18] sm:$0xff]
        %v1927 = vld [vmem:[#allocation10 + $0x20] sm:$0xff]
        %v1928 = vld [vmem:[#allocation10 + $0x28] sm:$0xff]
        %v1929 = vld [vmem:[#allocation10 + $0x30] sm:$0xff]
        %v1930 = vld [vmem:[#allocation10 + $0x38] sm:$0xff]
        %v1931 = vld [vmem:[#allocation10 + $0x40] sm:$0xff]
        %v1932 = vld [vmem:[#allocation10 + $0x48] sm:$0xff]
        %v1933 = vld [vmem:[#allocation10 + $0x50] sm:$0xff]
        %v1934 = vld [vmem:[#allocation10 + $0x58] sm:$0xff]
        %v1935 = vld [vmem:[#allocation10 + $0x60] sm:$0xff]
        %v1936 = vld [vmem:[#allocation10 + $0x68] sm:$0xff]
        %v1937 = vld [vmem:[#allocation10 + $0x70] sm:$0xff]
        %v1938 = vld [vmem:[#allocation10 + $0x78] sm:$0xff]
        %v1939 = vld [vmem:[#allocation10 + $0x80] sm:$0xff]
        %v1940 = vld [vmem:[#allocation10 + $0x88] sm:$0xff]
        %v1941 = vld [vmem:[#allocation10 + $0x90] sm:$0xff]
        %v1942 = vld [vmem:[#allocation10 + $0x98] sm:$0xff]
        %v1943 = vld [vmem:[#allocation10 + $0xa0] sm:$0xff]
        %v1944 = vld [vmem:[#allocation10 + $0xa8] sm:$0xff]
        %v1945 = vld [vmem:[#allocation10 + $0xb0] sm:$0xff]
        %v1946 = vld [vmem:[#allocation10 + $0xb8] sm:$0xff]
        %v1947 = vld [vmem:[#allocation10 + $0xc0] sm:$0xff]
        %v1948 = vld [vmem:[#allocation10 + $0xc8] sm:$0xff]
        %v1949 = vld [vmem:[#allocation10 + $0xd0] sm:$0xff]
        %v1950 = vld [vmem:[#allocation10 + $0xd8] sm:$0xff]
        %v1951 = vld [vmem:[#allocation10 + $0xe0] sm:$0xff]
        %v1952 = vld [vmem:[#allocation10 + $0xe8] sm:$0xff]
        %v1953 = vld [vmem:[#allocation10 + $0xf0] sm:$0xff]
        %v1954 = vld [vmem:[#allocation10 + $0xf8] sm:$0xff]
        %v1987 = vunpack.c.l.b16 %v1923
        %v1988 = vunpack.c.h.b16 %v1923
        %v1989 = vunpack.c.l.b16 %v1924
        %v1990 = vunpack.c.h.b16 %v1924
        %v1991 = vunpack.c.l.b16 %v1925
        %v1992 = vunpack.c.h.b16 %v1925
        %v1993 = vunpack.c.l.b16 %v1926
        %v1994 = vunpack.c.h.b16 %v1926
        %v1995 = vunpack.c.l.b16 %v1927
        %v1996 = vunpack.c.h.b16 %v1927
        %v1997 = vunpack.c.l.b16 %v1928
        %v1998 = vunpack.c.h.b16 %v1928
        %v1999 = vunpack.c.l.b16 %v1929
        %v2000 = vunpack.c.h.b16 %v1929
        %v2001 = vunpack.c.l.b16 %v1930
        %v2002 = vunpack.c.h.b16 %v1930
        %v2003 = vunpack.c.l.b16 %v1931
        %v2004 = vunpack.c.h.b16 %v1931
        %v2005 = vunpack.c.l.b16 %v1932
        %v2006 = vunpack.c.h.b16 %v1932
        %v2007 = vunpack.c.l.b16 %v1933
        %v2008 = vunpack.c.h.b16 %v1933
        %v2009 = vunpack.c.l.b16 %v1934
        %v2010 = vunpack.c.h.b16 %v1934
        %v2011 = vunpack.c.l.b16 %v1935
        %v2012 = vunpack.c.h.b16 %v1935
        %v2013 = vunpack.c.l.b16 %v1936
        %v2014 = vunpack.c.h.b16 %v1936
        %v2015 = vunpack.c.l.b16 %v1937
        %v2016 = vunpack.c.h.b16 %v1937
        %v2017 = vunpack.c.l.b16 %v1938
        %v2018 = vunpack.c.h.b16 %v1938
        %v2019 = vunpack.c.l.b16 %v1939
        %v2020 = vunpack.c.h.b16 %v1939
        %v2021 = vunpack.c.l.b16 %v1940
        %v2022 = vunpack.c.h.b16 %v1940
        %v2023 = vunpack.c.l.b16 %v1941
        %v2024 = vunpack.c.h.b16 %v1941
        %v2025 = vunpack.c.l.b16 %v1942
        %v2026 = vunpack.c.h.b16 %v1942
        %v2027 = vunpack.c.l.b16 %v1943
        %v2028 = vunpack.c.h.b16 %v1943
        %v2029 = vunpack.c.l.b16 %v1944
        %v2030 = vunpack.c.h.b16 %v1944
        %v2031 = vunpack.c.l.b16 %v1945
        %v2032 = vunpack.c.h.b16 %v1945
        %v2033 = vunpack.c.l.b16 %v1946
        %v2034 = vunpack.c.h.b16 %v1946
        %v2035 = vunpack.c.l.b16 %v1947
        %v2036 = vunpack.c.h.b16 %v1947
        %v2037 = vunpack.c.l.b16 %v1948
        %v2038 = vunpack.c.h.b16 %v1948
        %v2039 = vunpack.c.l.b16 %v1949
        %v2040 = vunpack.c.h.b16 %v1949
        %v2041 = vunpack.c.l.b16 %v1950
        %v2042 = vunpack.c.h.b16 %v1950
        %v2043 = vunpack.c.l.b16 %v1951
        %v2044 = vunpack.c.h.b16 %v1951
        %v2045 = vunpack.c.l.b16 %v1952
        %v2046 = vunpack.c.h.b16 %v1952
        %v2047 = vunpack.c.l.b16 %v1953
        %v2048 = vunpack.c.h.b16 %v1953
        %v2049 = vunpack.c.l.b16 %v1954
        %v2050 = vunpack.c.h.b16 %v1954
        %v2051 = vpack.c.b16 %v1989, %v1987
        %v2052 = vpack.c.b16 %v1990, %v1988
        %v2053 = vpack.c.b16 %v1993, %v1991
        %v2054 = vpack.c.b16 %v1994, %v1992
        %v2055 = vpack.c.b16 %v1997, %v1995
        %v2056 = vpack.c.b16 %v1998, %v1996
        %v2057 = vpack.c.b16 %v2001, %v1999
        %v2058 = vpack.c.b16 %v2002, %v2000
        %v2059 = vpack.c.b16 %v2005, %v2003
        %v2060 = vpack.c.b16 %v2006, %v2004
        %v2061 = vpack.c.b16 %v2009, %v2007
        %v2062 = vpack.c.b16 %v2010, %v2008
        %v2063 = vpack.c.b16 %v2013, %v2011
        %v2064 = vpack.c.b16 %v2014, %v2012
        %v2065 = vpack.c.b16 %v2017, %v2015
        %v2066 = vpack.c.b16 %v2018, %v2016
        %v2067 = vpack.c.b16 %v2021, %v2019
        %v2068 = vpack.c.b16 %v2022, %v2020
        %v2069 = vpack.c.b16 %v2025, %v2023
        %v2070 = vpack.c.b16 %v2026, %v2024
        %v2071 = vpack.c.b16 %v2029, %v2027
        %v2072 = vpack.c.b16 %v2030, %v2028
        %v2073 = vpack.c.b16 %v2033, %v2031
        %v2074 = vpack.c.b16 %v2034, %v2032
        %v2075 = vpack.c.b16 %v2037, %v2035
        %v2076 = vpack.c.b16 %v2038, %v2036
        %v2077 = vpack.c.b16 %v2041, %v2039
        %v2078 = vpack.c.b16 %v2042, %v2040
        %v2079 = vpack.c.b16 %v2045, %v2043
        %v2080 = vpack.c.b16 %v2046, %v2044
        %v2081 = vpack.c.b16 %v2049, %v2047
        %v2082 = vpack.c.b16 %v2050, %v2048
        %2115 = vmatpush.bf16.msra.mxu0 %v2065
        %2116 = vmatpush.bf16.msra.mxu0 %v2063
        %2117 = vmatpush.bf16.msra.mxu0 %v2061
        %2118 = vmatpush.bf16.msra.mxu0 %v2059
        %2119 = vmatpush.bf16.msra.mxu0 %v2057
        %2120 = vmatpush.bf16.msra.mxu0 %v2055
        %2121 = vmatpush.bf16.msra.mxu0 %v2053
        %2122 = vmatpush.bf16.msra.mxu0 %v2051
        %2123 = vmatmul.bf16.gmra.mxu0 %v1889
        %v2124 = vpop.f32.mrf.mxu0
        %v2125 = vadd.f32 0.0, %v2124
        %v2126 = vpop.f32.mrf.mxu0
        %2127 = vdwg.mxu0
        %2128 = vmatpush.bf16.msra.mxu0 %v2081
        %2129 = vmatpush.bf16.msra.mxu0 %v2079
        %2130 = vmatpush.bf16.msra.mxu0 %v2077
        %2131 = vmatpush.bf16.msra.mxu0 %v2075
        %2132 = vmatpush.bf16.msra.mxu0 %v2073
        %2133 = vmatpush.bf16.msra.mxu0 %v2071
        %2134 = vmatpush.bf16.msra.mxu0 %v2069
        %2135 = vmatpush.bf16.msra.mxu0 %v2067
        %2136 = vmatmul.bf16.gmra.mxu0 %v1890
        %v2137 = vpop.f32.mrf.mxu0
        %v2138 = vadd.f32 %v2125, %v2137
        %v2139 = vpop.f32.mrf.mxu0
        %2140 = vdwg.mxu0
        %2141 = vmatpush.bf16.msra.mxu0 %v2066
        %2142 = vmatpush.bf16.msra.mxu0 %v2064
        %2143 = vmatpush.bf16.msra.mxu0 %v2062
        %2144 = vmatpush.bf16.msra.mxu0 %v2060
        %2145 = vmatpush.bf16.msra.mxu0 %v2058
        %2146 = vmatpush.bf16.msra.mxu0 %v2056
        %2147 = vmatpush.bf16.msra.mxu0 %v2054
        %2148 = vmatpush.bf16.msra.mxu0 %v2052
        %2149 = vmatmul.bf16.gmra.mxu0 %v1889
        %v2150 = vpop.f32.mrf.mxu0
        %v2151 = vadd.f32 0.0, %v2150
        %v2152 = vpop.f32.mrf.mxu0
        %2153 = vdwg.mxu0
        %2154 = vmatpush.bf16.msra.mxu0 %v2082
        %2155 = vmatpush.bf16.msra.mxu0 %v2080
        %2156 = vmatpush.bf16.msra.mxu0 %v2078
        %2157 = vmatpush.bf16.msra.mxu0 %v2076
        %2158 = vmatpush.bf16.msra.mxu0 %v2074
        %2159 = vmatpush.bf16.msra.mxu0 %v2072
        %2160 = vmatpush.bf16.msra.mxu0 %v2070
        %2161 = vmatpush.bf16.msra.mxu0 %v2068
        %2162 = vmatmul.bf16.gmra.mxu0 %v1890
        %v2163 = vpop.f32.mrf.mxu0
        %v2164 = vadd.f32 %v2151, %v2163
        %v2165 = vpop.f32.mrf.mxu0
        %2166 = vdwg.mxu0
        %v2199 = vunpack.c.l.b16 %v1891
        %v2200 = vunpack.c.h.b16 %v1891
        %v2201 = vunpack.c.l.b16 %v1892
        %v2202 = vunpack.c.h.b16 %v1892
        %v2203 = vunpack.c.l.b16 %v1893
        %v2204 = vunpack.c.h.b16 %v1893
        %v2205 = vunpack.c.l.b16 %v1894
        %v2206 = vunpack.c.h.b16 %v1894
        %v2207 = vunpack.c.l.b16 %v1895
        %v2208 = vunpack.c.h.b16 %v1895
        %v2209 = vunpack.c.l.b16 %v1896
        %v2210 = vunpack.c.h.b16 %v1896
        %v2211 = vunpack.c.l.b16 %v1897
        %v2212 = vunpack.c.h.b16 %v1897
        %v2213 = vunpack.c.l.b16 %v1898
        %v2214 = vunpack.c.h.b16 %v1898
        %v2215 = vunpack.c.l.b16 %v1899
        %v2216 = vunpack.c.h.b16 %v1899
        %v2217 = vunpack.c.l.b16 %v1900
        %v2218 = vunpack.c.h.b16 %v1900
        %v2219 = vunpack.c.l.b16 %v1901
        %v2220 = vunpack.c.h.b16 %v1901
        %v2221 = vunpack.c.l.b16 %v1902
        %v2222 = vunpack.c.h.b16 %v1902
        %v2223 = vunpack.c.l.b16 %v1903
        %v2224 = vunpack.c.h.b16 %v1903
        %v2225 = vunpack.c.l.b16 %v1904
        %v2226 = vunpack.c.h.b16 %v1904
        %v2227 = vunpack.c.l.b16 %v1905
        %v2228 = vunpack.c.h.b16 %v1905
        %v2229 = vunpack.c.l.b16 %v1906
        %v2230 = vunpack.c.h.b16 %v1906
        %v2231 = vunpack.c.l.b16 %v1907
        %v2232 = vunpack.c.h.b16 %v1907
        %v2233 = vunpack.c.l.b16 %v1908
        %v2234 = vunpack.c.h.b16 %v1908
        %v2235 = vunpack.c.l.b16 %v1909
        %v2236 = vunpack.c.h.b16 %v1909
        %v2237 = vunpack.c.l.b16 %v1910
        %v2238 = vunpack.c.h.b16 %v1910
        %v2239 = vunpack.c.l.b16 %v1911
        %v2240 = vunpack.c.h.b16 %v1911
        %v2241 = vunpack.c.l.b16 %v1912
        %v2242 = vunpack.c.h.b16 %v1912
        %v2243 = vunpack.c.l.b16 %v1913
        %v2244 = vunpack.c.h.b16 %v1913
        %v2245 = vunpack.c.l.b16 %v1914
        %v2246 = vunpack.c.h.b16 %v1914
        %v2247 = vunpack.c.l.b16 %v1915
        %v2248 = vunpack.c.h.b16 %v1915
        %v2249 = vunpack.c.l.b16 %v1916
        %v2250 = vunpack.c.h.b16 %v1916
        %v2251 = vunpack.c.l.b16 %v1917
        %v2252 = vunpack.c.h.b16 %v1917
        %v2253 = vunpack.c.l.b16 %v1918
        %v2254 = vunpack.c.h.b16 %v1918
        %v2255 = vunpack.c.l.b16 %v1919
        %v2256 = vunpack.c.h.b16 %v1919
        %v2257 = vunpack.c.l.b16 %v1920
        %v2258 = vunpack.c.h.b16 %v1920
        %v2259 = vunpack.c.l.b16 %v1921
        %v2260 = vunpack.c.h.b16 %v1921
        %v2261 = vunpack.c.l.b16 %v1922
        %v2262 = vunpack.c.h.b16 %v1922
        %v2263 = vpack.c.b16 %v2201, %v2199
        %v2264 = vpack.c.b16 %v2202, %v2200
        %v2265 = vpack.c.b16 %v2205, %v2203
        %v2266 = vpack.c.b16 %v2206, %v2204
        %v2267 = vpack.c.b16 %v2209, %v2207
        %v2268 = vpack.c.b16 %v2210, %v2208
        %v2269 = vpack.c.b16 %v2213, %v2211
        %v2270 = vpack.c.b16 %v2214, %v2212
        %v2271 = vpack.c.b16 %v2217, %v2215
        %v2272 = vpack.c.b16 %v2218, %v2216
        %v2273 = vpack.c.b16 %v2221, %v2219
        %v2274 = vpack.c.b16 %v2222, %v2220
        %v2275 = vpack.c.b16 %v2225, %v2223
        %v2276 = vpack.c.b16 %v2226, %v2224
        %v2277 = vpack.c.b16 %v2229, %v2227
        %v2278 = vpack.c.b16 %v2230, %v2228
        %v2279 = vpack.c.b16 %v2233, %v2231
        %v2280 = vpack.c.b16 %v2234, %v2232
        %v2281 = vpack.c.b16 %v2237, %v2235
        %v2282 = vpack.c.b16 %v2238, %v2236
        %v2283 = vpack.c.b16 %v2241, %v2239
        %v2284 = vpack.c.b16 %v2242, %v2240
        %v2285 = vpack.c.b16 %v2245, %v2243
        %v2286 = vpack.c.b16 %v2246, %v2244
        %v2287 = vpack.c.b16 %v2249, %v2247
        %v2288 = vpack.c.b16 %v2250, %v2248
        %v2289 = vpack.c.b16 %v2253, %v2251
        %v2290 = vpack.c.b16 %v2254, %v2252
        %v2291 = vpack.c.b16 %v2257, %v2255
        %v2292 = vpack.c.b16 %v2258, %v2256
        %v2293 = vpack.c.b16 %v2261, %v2259
        %v2294 = vpack.c.b16 %v2262, %v2260
        %2327 = vmatpush.bf16.msra.mxu0 %v2277
        %2328 = vmatpush.bf16.msra.mxu0 %v2275
        %2329 = vmatpush.bf16.msra.mxu0 %v2273
        %2330 = vmatpush.bf16.msra.mxu0 %v2271
        %2331 = vmatpush.bf16.msra.mxu0 %v2269
        %2332 = vmatpush.bf16.msra.mxu0 %v2267
        %2333 = vmatpush.bf16.msra.mxu0 %v2265
        %2334 = vmatpush.bf16.msra.mxu0 %v2263
        %2335 = vmatmul.bf16.gmra.mxu0 %v1885
        %v2336 = vpop.f32.mrf.mxu0
        %v2337 = vadd.f32 %v2138, %v2336
        %v2338 = vpop.f32.mrf.mxu0
        %2339 = vdwg.mxu0
        %2340 = vmatpush.bf16.msra.mxu0 %v2293
        %2341 = vmatpush.bf16.msra.mxu0 %v2291
        %2342 = vmatpush.bf16.msra.mxu0 %v2289
        %2343 = vmatpush.bf16.msra.mxu0 %v2287
        %2344 = vmatpush.bf16.msra.mxu0 %v2285
        %2345 = vmatpush.bf16.msra.mxu0 %v2283
        %2346 = vmatpush.bf16.msra.mxu0 %v2281
        %2347 = vmatpush.bf16.msra.mxu0 %v2279
        %2348 = vmatmul.bf16.gmra.mxu0 %v1886
        %v2349 = vpop.f32.mrf.mxu0
        %v2350 = vadd.f32 %v2337, %v2349
        %v2351 = vpop.f32.mrf.mxu0
        %2352 = vdwg.mxu0
        %2353 = vmatpush.bf16.msra.mxu0 %v2278
        %2354 = vmatpush.bf16.msra.mxu0 %v2276
        %2355 = vmatpush.bf16.msra.mxu0 %v2274
        %2356 = vmatpush.bf16.msra.mxu0 %v2272
        %2357 = vmatpush.bf16.msra.mxu0 %v2270
        %2358 = vmatpush.bf16.msra.mxu0 %v2268
        %2359 = vmatpush.bf16.msra.mxu0 %v2266
        %2360 = vmatpush.bf16.msra.mxu0 %v2264
        %2361 = vmatmul.bf16.gmra.mxu0 %v1885
        %v2362 = vpop.f32.mrf.mxu0
        %v2363 = vadd.f32 %v2164, %v2362
        %v2364 = vpop.f32.mrf.mxu0
        %2365 = vdwg.mxu0
        %2366 = vmatpush.bf16.msra.mxu0 %v2294
        %2367 = vmatpush.bf16.msra.mxu0 %v2292
        %2368 = vmatpush.bf16.msra.mxu0 %v2290
        %2369 = vmatpush.bf16.msra.mxu0 %v2288
        %2370 = vmatpush.bf16.msra.mxu0 %v2286
        %2371 = vmatpush.bf16.msra.mxu0 %v2284
        %2372 = vmatpush.bf16.msra.mxu0 %v2282
        %2373 = vmatpush.bf16.msra.mxu0 %v2280
        %2374 = vmatmul.bf16.gmra.mxu0 %v1886
        %v2375 = vpop.f32.mrf.mxu0
        %v2376 = vadd.f32 %v2363, %v2375
        %v2377 = vpop.f32.mrf.mxu0
        %2378 = vdwg.mxu0
        %v2379 = vxor.u32 %v2350, 2147483648
        %v2380 = vxor.u32 %v2376, 2147483648
        %v2381 = vmul.f32 %v2379, 1.442695
        %v2382 = vpow.pop %v2381
        %v2383 = vmul.f32 %v2380, 1.442695
        %v2384 = vpow.pop %v2383
        %v2385 = vadd.f32 %v2382, 1.0
        %v2386 = vadd.f32 %v2384, 1.0
        %v2387 = vrcp.pop %v2385
        %v2388 = vmul.f32 %v2385, %v2387
        %v2389 = vsub.f32 1.0, %v2388
        %v2390 = vmul.f32 %v2387, %v2389
        %v2391 = vadd.f32 %v2387, %v2390
        %vm2392 = vweird.f32 %v2385
        %vm2393 = vweird.f32 %v2387
        %vm2394 = vmor %vm2392, %vm2393
        %v2395 = vsel %vm2394, %v2387, %v2391
        %v2396 = vand.u32 2147483647, %v2385
        %vm2397 = vcmp.eq.f32.partialorder %v2396, 8.507059e+37
        %v2398 = vand.u32 %v2385, 2147483648
        %v2399 = vor.u32 1.1754944e-38, %v2398
        %v2400 = vsel %vm2397, %v2399, %v2395
        %v2401 = vmul.f32 1.0, %v2400
        %v2402 = vrcp.pop %v2386
        %v2403 = vmul.f32 %v2386, %v2402
        %v2404 = vsub.f32 1.0, %v2403
        %v2405 = vmul.f32 %v2402, %v2404
        %v2406 = vadd.f32 %v2402, %v2405
        %vm2407 = vweird.f32 %v2386
        %vm2408 = vweird.f32 %v2402
        %vm2409 = vmor %vm2407, %vm2408
        %v2410 = vsel %vm2409, %v2402, %v2406
        %v2411 = vand.u32 2147483647, %v2386
        %vm2412 = vcmp.eq.f32.partialorder %v2411, 8.507059e+37
        %v2413 = vand.u32 %v2386, 2147483648
        %v2414 = vor.u32 1.1754944e-38, %v2413
        %v2415 = vsel %vm2412, %v2414, %v2410
        %v2416 = vmul.f32 1.0, %v2415
        %v2417 = vperm.slane %v2401, 0
        %v2418 = vperm.slane %v2416, 0
        %v2419 = vmul.f32 %v762, %v2417
        %v2420 = vmul.f32 %v762, %v2418
        %v2421 = vmul.f32 %v768, %v2417
        %v2422 = vmul.f32 %v768, %v2418
        %v2423 = vmul.f32 %v774, %v2417
        %v2424 = vmul.f32 %v774, %v2418
        %v2425 = vmul.f32 %v780, %v2417
        %v2426 = vmul.f32 %v780, %v2418
        %v2427 = vmul.f32 %v500, %v2419
        %v2428 = vmul.f32 %v501, %v2420
        %v2429 = vmul.f32 %v502, %v2421
        %v2430 = vmul.f32 %v503, %v2422
        %v2431 = vmul.f32 %v504, %v2423
        %v2432 = vmul.f32 %v505, %v2424
        %v2433 = vmul.f32 %v506, %v2425
        %v2434 = vmul.f32 %v507, %v2426
        %2435 = vst [vmem:[%s499] sm:$0xff] %v2427
        %2436 = vst [vmem:[%s499 + $0x8] sm:$0xff] %v2428
        %2437 = vst [vmem:[%s499 + $0x10] sm:$0xff] %v2429
        %2438 = vst [vmem:[%s499 + $0x18] sm:$0xff] %v2430
        %2439 = vst [vmem:[%s499 + $0x20] sm:$0xff] %v2431
        %2440 = vst [vmem:[%s499 + $0x28] sm:$0xff] %v2432
        %2441 = vst [vmem:[%s499 + $0x30] sm:$0xff] %v2433
        %2442 = vst [vmem:[%s499 + $0x38] sm:$0xff] %v2434
        %s2443 = sand.u32 %s296, 1
        %s2444 = scalar_lea.sflag [#allocation4], %s2443
        %s2445 = sand.u32 %s296, 1
        %s2446 = smul.addr %s2445, 64
        %s2447 = scalar_lea.vmem [#allocation11], %s2446
        // Predicated region
        $region89: #{tpu_custom_call.1} parent=67 // pred_check
          %p2448 = pneg %p306
        $region90: #{tpu_custom_call.1} parent=67 // pred_check_branch
          %2450 = sbr.rel (%p2448) target = $region92
        $region91: #{tpu_custom_call.1} parent=67 // pred_region
          %2452 = vsyncadd %s2444, 0
          %s2453 = smul.addr %s31, 8
          %s2454 = smul.addr %s2453, 8
          %s2455 = scalar_lea.hbm %s12, %s2454
          %s2456 = sshll.u32 %s2447, 4
          %s2457 = int_to_ptr.vmem [resolvable:$true] %s2456
          %s2458 = sshll.u32 %s2455, 4
          %s2459 = int_to_ptr.hbm [resolvable:$true] %s2458
          %2464 = dma.vmem_to_hbm [thread:$0]  %s2457, 1024, %s2459, %s2444, 256, 256, 16
        $region92: #{tpu_custom_call.1} parent=67 // pred_fallthru
          _
      $region68: #{tpu_custom_call.1} parent=5 // pred_fallthru
        _
      %p2465 = scmp.le.s32.totalorder 2, %s26
      // Predicated region
      $region93: #{tpu_custom_call.1} parent=5 // pred_check
        %p2466 = pneg %p2465
      $region94: #{tpu_custom_call.1} parent=5 // pred_check_branch
        %2468 = sbr.rel (%p2466) target = $region96
      $region95: #{tpu_custom_call.1} parent=5 // pred_region
        %s2469 = ssub.s32 %s26, 2
        // Predicated region
        $region97: #{tpu_custom_call.1} parent=95 // pred_check
          %p2470 = pneg %p312
        $region98: #{tpu_custom_call.1} parent=95 // pred_check_branch
          %2472 = sbr.rel (%p2470) target = $region100
        $region99: #{tpu_custom_call.1} parent=95 // pred_region
          %s2473 = sand.u32 %s297, 1
          %s2474 = scalar_lea.sflag [#allocation4], %s2473
          %s2475 = sand.u32 %s297, 1
          %s2476 = smul.addr %s2475, 64
          %s2477 = scalar_lea.vmem [#allocation11], %s2476
          %2479 = dma.done %s2474, 1024
        $region100: #{tpu_custom_call.1} parent=95 // pred_fallthru
          _
      $region96: #{tpu_custom_call.1} parent=5 // pred_fallthru
        _
    $region6: #{tpu_custom_call.1} parent=1 // loop_footer
      %s30 = sadd.s32 1, %s26
    $region7: #{tpu_custom_call.1} parent=1 // loop_footer_branch
      %25 = sbr.rel target = $region3
    $region8: #{tpu_custom_call.1} parent=1 // loop_exit
      _
    %2480 = vsyncpa [#allocation3], 1
    %s2481 = scalar_lea.sflag [#allocation3], 1
    %2482 = vsyncpa %s2481, 1
    %2483 = vsyncpa [#allocation6], 1
    %2484 = vsyncpa [#allocation9], 1
    %2485 = vsyncpa [#allocation4], 1
    %s2486 = scalar_lea.sflag [#allocation4], 1
    %2487 = vsyncpa %s2486, 1

</llo_original>
